<compile_context>
chip_gen: v6e
topology: v6e:2x2x1
jax: 0.10.0
libtpu: 0.0.40
codegen_flags: <defaults>
</compile_context>

<pallas_src>
import functools

import jax
import jax.numpy as jnp
from jax import lax
from jax.experimental import pallas as pl
from jax.experimental.pallas import tpu as pltpu
import numpy as np


def _round_up(x, m):
    return (x + m - 1) // m * m


def energy_kernel(x_ref, w_in_ref, wp_ref, wkqv_ref, w_out_ref, out_ref, *,
                  n_layers, c_pad, compute_dtype):
    # x_ref:     (Bt, T, D_in_p)     w_in_ref:  (D_in_p, C_p)
    # wp_ref:    (L, C_p, C_p)       wkqv_ref:  (L, C_p, 3*C_p)
    # w_out_ref: (C_p, O_p)          out_ref:   (Bt, T, O_p)
    bt, T, d_in = x_ref.shape
    rows = bt * T

    x = x_ref[...].reshape(rows, d_in)                               # (rows, D_in_p)
    # Interface: Linear(D_in -> C), weight pre-transposed -> plain x @ W
    h = jnp.dot(x, w_in_ref[...], preferred_element_type=jnp.float32)  # f32 (rows, C_p)

    # Causal mask for triu(q @ k^T): keep source index s >= target index t.
    # (== the tril(k @ q^T)^T pattern of the PyTorch Block, diagonal inclusive.)
    t_idx = lax.broadcasted_iota(jnp.int32, (T, T), 0)
    s_idx = lax.broadcasted_iota(jnp.int32, (T, T), 1)
    keep = s_idx >= t_idx

    for l in range(n_layers):
        wp = wp_ref[l]                                               # (C_p, C_p)
        wkqv = wkqv_ref[l]                                           # (C_p, 3*C_p)
        h = jnp.dot(h.astype(compute_dtype), wp,
                    preferred_element_type=jnp.float32)              # proj
        kqv = jnp.dot(h.astype(compute_dtype), wkqv,
                      preferred_element_type=jnp.float32)            # fused k|q|v
        k = kqv[:, :c_pad].astype(compute_dtype).reshape(bt, T, c_pad)
        q = kqv[:, c_pad:2 * c_pad].astype(compute_dtype).reshape(bt, T, c_pad)
        v = kqv[:, 2 * c_pad:].astype(compute_dtype).reshape(bt, T, c_pad)
        s = jnp.einsum("btc,bsc->bts", q, k,
                       preferred_element_type=jnp.float32)           # q @ k^T (f32)
        s = jnp.where(keep[None], s, 0.0)                            # causal mask (f32)
        h = jnp.tanh(jnp.einsum("bts,bsc->btc", s.astype(compute_dtype), v,
                                preferred_element_type=jnp.float32)) # f32 epilogue
        h = h.reshape(rows, c_pad)

    out = jnp.dot(h.astype(compute_dtype), w_out_ref[...],
                  preferred_element_type=jnp.float32)                # (rows, O_p)
    out_ref[...] = out.reshape(bt, T, -1).astype(out_ref.dtype)


def energy_forward(x, params, *, block_size, n_layers,
                   compute_dtype=jnp.bfloat16, batch_tile=1):
    """x: (batch, input_channels, time) -> (batch, n_blocks, block_size) float32."""
    batch, channels, time = x.shape
    assert time % block_size == 0
    assert batch % batch_tile == 0
    n_blocks = time // block_size
    d_in = channels * block_size
    C = params["w_in"].shape[0]

    c_pad = _round_up(C, 128)
    d_in_pad = _round_up(d_in, 128)
    o_pad = _round_up(block_size, 128)

    # Blocking glue: unfold -> permute -> reshape (plain XLA), pad lane dim.
    blocked = x.reshape(batch, channels, n_blocks, block_size)
    blocked = blocked.transpose(0, 2, 1, 3).reshape(batch, n_blocks, d_in)
    blocked = jnp.pad(blocked, ((0, 0), (0, 0), (0, d_in_pad - d_in)))
    blocked = blocked.astype(compute_dtype)

    # Weights: pre-transpose once, zero-pad to lane multiples, fuse k/q/v, cast.
    def pad2(w, r, c):
        return jnp.pad(w, ((0, r - w.shape[0]), (0, c - w.shape[1])))

    def pad3_t(w):  # (L, C, C) -> transposed + padded (L, C_p, C_p)
        return jnp.pad(jnp.transpose(w, (0, 2, 1)),
                       ((0, 0), (0, c_pad - C), (0, c_pad - C)))

    w_in_t = pad2(params["w_in"].T, d_in_pad, c_pad).astype(compute_dtype)
    wp_t = pad3_t(params["wp"]).astype(compute_dtype)
    wkqv_t = jnp.concatenate(
        [pad3_t(params["wk"]), pad3_t(params["wq"]), pad3_t(params["wv"])],
        axis=2).astype(compute_dtype)                                # (L, C_p, 3*C_p)
    w_out_t = pad2(params["w_out"].T, c_pad, o_pad).astype(compute_dtype)

    kernel = functools.partial(energy_kernel, n_layers=n_layers, c_pad=c_pad,
                               compute_dtype=compute_dtype)

    out = pl.pallas_call(
        kernel,
        out_shape=jax.ShapeDtypeStruct((batch, n_blocks, o_pad), jnp.float32),
        grid_spec=pltpu.PrefetchScalarGridSpec(
            num_scalar_prefetch=0,
            grid=(batch // batch_tile,),
            in_specs=[
                pl.BlockSpec((batch_tile, n_blocks, d_in_pad), lambda b: (b, 0, 0)),
                pl.BlockSpec((d_in_pad, c_pad), lambda b: (0, 0)),
                pl.BlockSpec((n_layers, c_pad, c_pad), lambda b: (0, 0, 0)),
                pl.BlockSpec((n_layers, c_pad, 3 * c_pad), lambda b: (0, 0, 0)),
                pl.BlockSpec((c_pad, o_pad), lambda b: (0, 0)),
            ],
            out_specs=pl.BlockSpec((batch_tile, n_blocks, o_pad),
                                   lambda b: (b, 0, 0)),
        ),
        compiler_params=pltpu.CompilerParams(
            dimension_semantics=("parallel",)),
    )(blocked, w_in_t, wp_t, wkqv_t, w_out_t)

    # Drop the lane padding on the sample dimension.
    return out[..., :block_size]


def energy_forward_ref(x, params, *, block_size, n_layers):
    """Pure-JAX reference mirroring the PyTorch forward exactly."""
    batch, channels, time = x.shape
    n_blocks = time // block_size
    blocked = x.reshape(batch, channels, n_blocks, block_size)
    blocked = blocked.transpose(0, 2, 1, 3).reshape(batch, n_blocks, channels * block_size)
    h = jnp.einsum("btd,cd->btc", blocked, params["w_in"])
    T = n_blocks
    mask = jnp.tril(jnp.ones((T, T), dtype=bool))
    for l in range(n_layers):
        h = jnp.einsum("btc,dc->btd", h, params["wp"][l])
        k = jnp.einsum("btc,dc->btd", h, params["wk"][l])
        q = jnp.einsum("btc,dc->btd", h, params["wq"][l])
        v = jnp.einsum("btc,dc->btd", h, params["wv"][l])
        m = jnp.einsum("btc,bsc->bts", k, q)
        m = jnp.where(mask[None], m, 0.0)
        h = jnp.tanh(jnp.einsum("bst,bsc->btc", m, v))
    return jnp.einsum("btc,oc->bto", h, params["w_out"])


def make_params(key, input_channels, model_channels, block_size, n_layers):
    # deterministic init (stand-in for make_initializer(0.1)): normal * 0.1
    ks = jax.random.split(key, 7)
    C = model_channels
    D_in = input_channels * block_size
    return {
        "w_in": 0.1 * jax.random.normal(ks[0], (C, D_in), jnp.float32),
        "wp": 0.1 * jax.random.normal(ks[1], (n_layers, C, C), jnp.float32),
        "wk": 0.1 * jax.random.normal(ks[2], (n_layers, C, C), jnp.float32),
        "wq": 0.1 * jax.random.normal(ks[3], (n_layers, C, C), jnp.float32),
        "wv": 0.1 * jax.random.normal(ks[4], (n_layers, C, C), jnp.float32),
        "w_out": 0.1 * jax.random.normal(ks[5], (block_size, C), jnp.float32),
    }


if __name__ == "__main__":
    batch = 2
    input_channels = 4
    block_size = 8
    model_channels = 32
    n_layers = 2
    time = 64  # -> n_blocks = 8

    key = jax.random.PRNGKey(0)
    kx, kp = jax.random.split(key)
    x = jax.random.normal(kx, (batch, input_channels, time), jnp.float32)
    params = make_params(kp, input_channels, model_channels, block_size, n_layers)

    ref = energy_forward_ref(x, params, block_size=block_size, n_layers=n_layers)

    # float32 path: strict check against the PyTorch-equivalent reference.
    out_f32 = energy_forward(x, params, block_size=block_size, n_layers=n_layers,
                             compute_dtype=jnp.float32, batch_tile=1)
    out_f32 = jax.block_until_ready(out_f32)
    np.testing.assert_allclose(np.asarray(out_f32), np.asarray(ref),
                               rtol=1e-4, atol=1e-5)

    # bfloat16 MXU path (f32 accumulation): loose tolerance.
    out_bf16 = energy_forward(x, params, block_size=block_size, n_layers=n_layers,
                              compute_dtype=jnp.bfloat16, batch_tile=1)
    out_bf16 = jax.block_until_ready(out_bf16)
    np.testing.assert_allclose(np.asarray(out_bf16), np.asarray(ref),
                               rtol=5e-2, atol=5e-2)

    print("KERNEL_OK")
</pallas_src>

<mosaic_0001>
module attributes {stable_mosaic.version = 11 : i64} {
  func.func @energy_kernel(%arg0: i32, %arg1: memref<1x8x128xf32, #tpu.memory_space<vmem>>, %arg2: memref<128x128xf32, #tpu.memory_space<vmem>>, %arg3: memref<2x128x128xf32, #tpu.memory_space<vmem>>, %arg4: memref<2x128x384xf32, #tpu.memory_space<vmem>>, %arg5: memref<128x128xf32, #tpu.memory_space<vmem>>, %arg6: memref<1x8x128xf32, #tpu.memory_space<vmem>>) attributes {dimension_semantics = [#tpu.dimension_semantics<parallel>], iteration_bounds = array<i64: 2>, scalar_prefetch = 0 : i64, scratch_operands = 0 : i64, tpu.core_type = #tpu.core_type<tc>, window_params = [{transform_indices = @transform_0, window_bounds = array<i64: 1, 8, 128>}, {pipeline_mode = #tpu.pipeline_mode<synchronous>, transform_indices = @transform_1, window_bounds = array<i64: 128, 128>}, {pipeline_mode = #tpu.pipeline_mode<synchronous>, transform_indices = @transform_2, window_bounds = array<i64: 2, 128, 128>}, {pipeline_mode = #tpu.pipeline_mode<synchronous>, transform_indices = @transform_3, window_bounds = array<i64: 2, 128, 384>}, {pipeline_mode = #tpu.pipeline_mode<synchronous>, transform_indices = @transform_4, window_bounds = array<i64: 128, 128>}, {transform_indices = @transform_5, window_bounds = array<i64: 1, 8, 128>}]} {
    %c0 = arith.constant 0 : index
    %c0_0 = arith.constant 0 : index
    %c0_1 = arith.constant 0 : index
    %0 = vector.load %arg1[%c0, %c0_0, %c0_1] : memref<1x8x128xf32, #tpu.memory_space<vmem>>, vector<1x8x128xf32>
    %1 = vector.shape_cast %0 : vector<1x8x128xf32> to vector<8x128xf32>
    %c0_2 = arith.constant 0 : index
    %c0_3 = arith.constant 0 : index
    %2 = vector.load %arg2[%c0_2, %c0_3] : memref<128x128xf32, #tpu.memory_space<vmem>>, vector<128x128xf32>
    %cst = arith.constant dense<0.000000e+00> : vector<8x128xf32>
    %3 = tpu.matmul %1, %2, %cst {dimension_numbers = #tpu.dot_dimension_numbers<[1], [0], [0], [1], [0, 0, 1, 1], [], []>} : vector<8x128xf32>, vector<128x128xf32>, vector<8x128xf32> -> vector<8x128xf32>
    %4 = tpu.iota {dimensions = array<i32: 0>} : vector<8x8xi32>
    %5 = tpu.iota {dimensions = array<i32: 1>} : vector<8x8xi32>
    %6 = arith.cmpi sge, %5, %4 : vector<8x8xi32>
    %c0_4 = arith.constant 0 : index
    %c0_5 = arith.constant 0 : index
    %c0_6 = arith.constant 0 : index
    %7 = vector.load %arg3[%c0_4, %c0_5, %c0_6] : memref<2x128x128xf32, #tpu.memory_space<vmem>>, vector<1x128x128xf32>
    %8 = vector.shape_cast %7 : vector<1x128x128xf32> to vector<128x128xf32>
    %c0_7 = arith.constant 0 : index
    %c0_8 = arith.constant 0 : index
    %c0_9 = arith.constant 0 : index
    %9 = vector.load %arg4[%c0_7, %c0_8, %c0_9] : memref<2x128x384xf32, #tpu.memory_space<vmem>>, vector<1x128x384xf32>
    %10 = vector.shape_cast %9 : vector<1x128x384xf32> to vector<128x384xf32>
    %cst_10 = arith.constant dense<0.000000e+00> : vector<8x128xf32>
    %11 = tpu.matmul %3, %8, %cst_10 {dimension_numbers = #tpu.dot_dimension_numbers<[1], [0], [0], [1], [0, 0, 1, 1], [], []>} : vector<8x128xf32>, vector<128x128xf32>, vector<8x128xf32> -> vector<8x128xf32>
    %cst_11 = arith.constant dense<0.000000e+00> : vector<8x384xf32>
    %12 = tpu.matmul %11, %10, %cst_11 {dimension_numbers = #tpu.dot_dimension_numbers<[1], [0], [0], [1], [0, 0, 1, 1], [], []>} : vector<8x128xf32>, vector<128x384xf32>, vector<8x384xf32> -> vector<8x384xf32>
    %13 = vector.extract_strided_slice %12 {offsets = [0, 0], sizes = [8, 128], strides = [1, 1]} : vector<8x384xf32> to vector<8x128xf32>
    %14 = vector.shape_cast %13 : vector<8x128xf32> to vector<1x8x128xf32>
    %15 = vector.extract_strided_slice %12 {offsets = [0, 128], sizes = [8, 128], strides = [1, 1]} : vector<8x384xf32> to vector<8x128xf32>
    %16 = vector.shape_cast %15 : vector<8x128xf32> to vector<1x8x128xf32>
    %17 = vector.extract_strided_slice %12 {offsets = [0, 256], sizes = [8, 128], strides = [1, 1]} : vector<8x384xf32> to vector<8x128xf32>
    %18 = vector.shape_cast %17 : vector<8x128xf32> to vector<1x8x128xf32>
    "tpu.trace_start"() <{level = 10 : i32, message = "btc,bsc->bts"}> : () -> ()
    %cst_12 = arith.constant dense<0.000000e+00> : vector<1x8x8xf32>
    %19 = tpu.matmul %16, %14, %cst_12 {dimension_numbers = #tpu.dot_dimension_numbers<[2], [2], [1], [1], [0, 0, 0, 1, 1, 1], [0], [0]>} : vector<1x8x128xf32>, vector<1x8x128xf32>, vector<1x8x8xf32> -> vector<1x8x8xf32>
    "tpu.trace_stop"() : () -> ()
    %20 = vector.shape_cast %6 : vector<8x8xi1> to vector<1x8x8xi1>
    %cst_13 = arith.constant 0.000000e+00 : f32
    %21 = vector.broadcast %cst_13 : f32 to vector<1x8x8xf32>
    %22 = arith.select %20, %19, %21 : vector<1x8x8xi1>, vector<1x8x8xf32>
    "tpu.trace_start"() <{level = 10 : i32, message = "bts,bsc->btc"}> : () -> ()
    %cst_14 = arith.constant dense<0.000000e+00> : vector<1x8x128xf32>
    %23 = tpu.matmul %22, %18, %cst_14 {dimension_numbers = #tpu.dot_dimension_numbers<[2], [1], [1], [2], [0, 0, 0, 1, 1, 2], [0], [0]>} : vector<1x8x8xf32>, vector<1x8x128xf32>, vector<1x8x128xf32> -> vector<1x8x128xf32>
    "tpu.trace_stop"() : () -> ()
    %24 = math.tanh %23 : vector<1x8x128xf32>
    %25 = vector.shape_cast %24 : vector<1x8x128xf32> to vector<8x128xf32>
    %c1 = arith.constant 1 : index
    %c0_15 = arith.constant 0 : index
    %c0_16 = arith.constant 0 : index
    %26 = vector.load %arg3[%c1, %c0_15, %c0_16] : memref<2x128x128xf32, #tpu.memory_space<vmem>>, vector<1x128x128xf32>
    %27 = vector.shape_cast %26 : vector<1x128x128xf32> to vector<128x128xf32>
    %c1_17 = arith.constant 1 : index
    %c0_18 = arith.constant 0 : index
    %c0_19 = arith.constant 0 : index
    %28 = vector.load %arg4[%c1_17, %c0_18, %c0_19] : memref<2x128x384xf32, #tpu.memory_space<vmem>>, vector<1x128x384xf32>
    %29 = vector.shape_cast %28 : vector<1x128x384xf32> to vector<128x384xf32>
    %cst_20 = arith.constant dense<0.000000e+00> : vector<8x128xf32>
    %30 = tpu.matmul %25, %27, %cst_20 {dimension_numbers = #tpu.dot_dimension_numbers<[1], [0], [0], [1], [0, 0, 1, 1], [], []>} : vector<8x128xf32>, vector<128x128xf32>, vector<8x128xf32> -> vector<8x128xf32>
    %cst_21 = arith.constant dense<0.000000e+00> : vector<8x384xf32>
    %31 = tpu.matmul %30, %29, %cst_21 {dimension_numbers = #tpu.dot_dimension_numbers<[1], [0], [0], [1], [0, 0, 1, 1], [], []>} : vector<8x128xf32>, vector<128x384xf32>, vector<8x384xf32> -> vector<8x384xf32>
    %32 = vector.extract_strided_slice %31 {offsets = [0, 0], sizes = [8, 128], strides = [1, 1]} : vector<8x384xf32> to vector<8x128xf32>
    %33 = vector.shape_cast %32 : vector<8x128xf32> to vector<1x8x128xf32>
    %34 = vector.extract_strided_slice %31 {offsets = [0, 128], sizes = [8, 128], strides = [1, 1]} : vector<8x384xf32> to vector<8x128xf32>
    %35 = vector.shape_cast %34 : vector<8x128xf32> to vector<1x8x128xf32>
    %36 = vector.extract_strided_slice %31 {offsets = [0, 256], sizes = [8, 128], strides = [1, 1]} : vector<8x384xf32> to vector<8x128xf32>
    %37 = vector.shape_cast %36 : vector<8x128xf32> to vector<1x8x128xf32>
    "tpu.trace_start"() <{level = 10 : i32, message = "btc,bsc->bts"}> : () -> ()
    %cst_22 = arith.constant dense<0.000000e+00> : vector<1x8x8xf32>
    %38 = tpu.matmul %35, %33, %cst_22 {dimension_numbers = #tpu.dot_dimension_numbers<[2], [2], [1], [1], [0, 0, 0, 1, 1, 1], [0], [0]>} : vector<1x8x128xf32>, vector<1x8x128xf32>, vector<1x8x8xf32> -> vector<1x8x8xf32>
    "tpu.trace_stop"() : () -> ()
    %39 = vector.shape_cast %6 : vector<8x8xi1> to vector<1x8x8xi1>
    %cst_23 = arith.constant 0.000000e+00 : f32
    %40 = vector.broadcast %cst_23 : f32 to vector<1x8x8xf32>
    %41 = arith.select %39, %38, %40 : vector<1x8x8xi1>, vector<1x8x8xf32>
    "tpu.trace_start"() <{level = 10 : i32, message = "bts,bsc->btc"}> : () -> ()
    %cst_24 = arith.constant dense<0.000000e+00> : vector<1x8x128xf32>
    %42 = tpu.matmul %41, %37, %cst_24 {dimension_numbers = #tpu.dot_dimension_numbers<[2], [1], [1], [2], [0, 0, 0, 1, 1, 2], [0], [0]>} : vector<1x8x8xf32>, vector<1x8x128xf32>, vector<1x8x128xf32> -> vector<1x8x128xf32>
    "tpu.trace_stop"() : () -> ()
    %43 = math.tanh %42 : vector<1x8x128xf32>
    %44 = vector.shape_cast %43 : vector<1x8x128xf32> to vector<8x128xf32>
    %c0_25 = arith.constant 0 : index
    %c0_26 = arith.constant 0 : index
    %45 = vector.load %arg5[%c0_25, %c0_26] : memref<128x128xf32, #tpu.memory_space<vmem>>, vector<128x128xf32>
    %cst_27 = arith.constant dense<0.000000e+00> : vector<8x128xf32>
    %46 = tpu.matmul %44, %45, %cst_27 {dimension_numbers = #tpu.dot_dimension_numbers<[1], [0], [0], [1], [0, 0, 1, 1], [], []>} : vector<8x128xf32>, vector<128x128xf32>, vector<8x128xf32> -> vector<8x128xf32>
    %47 = vector.shape_cast %46 : vector<8x128xf32> to vector<1x8x128xf32>
    %c0_28 = arith.constant 0 : index
    %c0_29 = arith.constant 0 : index
    %c0_30 = arith.constant 0 : index
    %48 = vector.load %arg6[%c0_28, %c0_29, %c0_30] : memref<1x8x128xf32, #tpu.memory_space<vmem>>, vector<1x8x128xf32>
    tpu.vector_store %arg6[%c0_28, %c0_29, %c0_30], %47 {strides = array<i32>} : memref<1x8x128xf32, #tpu.memory_space<vmem>>, vector<1x8x128xf32>,
    return
  }
  func.func @transform_0(%arg0: i32) -> (i32, i32, i32) {
    %c0_i32 = arith.constant 0 : i32
    %c0_i32_0 = arith.constant 0 : i32
    %c0_i32_1 = arith.constant 0 : i32
    return %arg0, %c0_i32, %c0_i32_0 : i32, i32, i32
  }
  func.func @transform_1(%arg0: i32) -> (i32, i32) {
    %c0_i32 = arith.constant 0 : i32
    %c0_i32_0 = arith.constant 0 : i32
    %c0_i32_1 = arith.constant 0 : i32
    return %c0_i32, %c0_i32_0 : i32, i32
  }
  func.func @transform_2(%arg0: i32) -> (i32, i32, i32) {
    %c0_i32 = arith.constant 0 : i32
    %c0_i32_0 = arith.constant 0 : i32
    %c0_i32_1 = arith.constant 0 : i32
    %c0_i32_2 = arith.constant 0 : i32
    return %c0_i32, %c0_i32_0, %c0_i32_1 : i32, i32, i32
  }
  func.func @transform_3(%arg0: i32) -> (i32, i32, i32) {
    %c0_i32 = arith.constant 0 : i32
    %c0_i32_0 = arith.constant 0 : i32
    %c0_i32_1 = arith.constant 0 : i32
    %c0_i32_2 = arith.constant 0 : i32
    return %c0_i32, %c0_i32_0, %c0_i32_1 : i32, i32, i32
  }
  func.func @transform_4(%arg0: i32) -> (i32, i32) {
    %c0_i32 = arith.constant 0 : i32
    %c0_i32_0 = arith.constant 0 : i32
    %c0_i32_1 = arith.constant 0 : i32
    return %c0_i32, %c0_i32_0 : i32, i32
  }
  func.func @transform_5(%arg0: i32) -> (i32, i32, i32) {
    %c0_i32 = arith.constant 0 : i32
    %c0_i32_0 = arith.constant 0 : i32
    %c0_i32_1 = arith.constant 0 : i32
    return %arg0, %c0_i32, %c0_i32_0 : i32, i32, i32
  }
}

</mosaic_0001>

<llo_original>
// kernel: tpu_custom_call.1
$region0: #{tpu_custom_call.1}
  #allocation0 [shape = 'u32[]', space=smem, size = 0x4, offset = 0x4, fixed_abs, tag = 'smem constant byte address 0x4 - core index']
  #allocation1 [shape = 'u32[144,128]{1,0:T(1,128)}', space=vmem, size = 0x12000, scoped, tag = 'internal scratch']
  %s0 = inlined_call_operand.hbm [shape: f32[2,8,128], index: 0, kind: input, shape index: {}]
  %s1 = inlined_call_operand.hbm [shape: f32[128,128], index: 1, kind: input, shape index: {}]
  %s2 = inlined_call_operand.hbm [shape: f32[2,128,128], index: 2, kind: input, shape index: {}]
  %s3 = inlined_call_operand.hbm [shape: f32[2,128,384], index: 3, kind: input, shape index: {}]
  %s4 = inlined_call_operand.hbm [shape: f32[128,128], index: 4, kind: input, shape index: {}]
  %s5 = inlined_call_operand.hbm [shape: f32[2,8,128], index: 5, kind: output, shape index: {}]
  %s6 = sld [smem:[#allocation0]]
  $region73: #{tpu_custom_call.1} parent=0
    _
  %s8 = ssub.s32 1, %s6
  %s9 = scalar_select 0, %s8, %s6
  $region1: #{tpu_custom_call.1} parent=0
    #allocation2 [shape = 'u8[8192]{0}', space=vmem, size = 0x2000, scoped, tag = 'input window, operand 0']
    #allocation3 [shape = 's32[2]{0}', space=sflag, size = 0x8, scoped, tag = 'scoped memory for tpu_custom_call.1']
    #allocation4 [shape = 's32[2]{0}', space=sflag, size = 0x8, scoped, tag = 'scoped memory for tpu_custom_call.1']
    #allocation5 [shape = 'u8[65536]{0}', space=vmem, size = 0x10000, scoped, tag = 'input window, operand 1, single buffered']
    #allocation6 [shape = 's32[1]{0}', space=sflag, size = 0x4, scoped, tag = 'scoped memory for tpu_custom_call.1']
    #allocation7 [shape = 'u8[131072]{0}', space=vmem, size = 0x20000, scoped, tag = 'input window, operand 2, single buffered']
    #allocation8 [shape = 'u8[393216]{0}', space=vmem, size = 0x60000, scoped, tag = 'input window, operand 3, single buffered']
    #allocation9 [shape = 's32[1]{0}', space=sflag, size = 0x4, scoped, tag = 'scoped memory for tpu_custom_call.1']
    #allocation10 [shape = 'u8[65536]{0}', space=vmem, size = 0x10000, scoped, tag = 'input window, operand 4, single buffered']
    #allocation11 [shape = 'u8[8192]{0}', space=vmem, size = 0x2000, scoped, tag = 'output window, operand 0']
    %10 = vsyncpa [#allocation3], 0
    %s11 = scalar_lea.sflag [#allocation3], 1
    %12 = vsyncpa %s11, 0
    %13 = vsyncpa [#allocation6], 0
    %14 = vsyncpa [#allocation9], 0
    %15 = vsyncpa [#allocation4], 0
    %s16 = scalar_lea.sflag [#allocation4], 1
    %17 = vsyncpa %s16, 0
    loop: start=0, step=1, limit=4
    $region2: #{tpu_custom_call.1} parent=1 // loop_pre_header
      _
    $region3: #{tpu_custom_call.1} parent=1 // loop_header
      %s19 = sphi 0, %s23
      %p20 = scmp.ge.s32.totalorder %s19, 4
      %s29 = sphi 0, %s31
      %s32 = sphi 0, %s29
      %s33 = sphi 0, %s32
      %s49 = sphi 0, %s33
      %s53 = sphi 0, %s53
      %s55 = sphi 0, %s53
      %s56 = sphi 0, %s55
      %s70 = sphi 0, %s56
      %s74 = sphi 0, %s74
      %s76 = sphi 0, %s74
      %s77 = sphi 0, %s76
      %s91 = sphi 0, %s77
      %s95 = sphi 0, %s95
      %s97 = sphi 0, %s95
      %s98 = sphi 0, %s97
      %s112 = sphi 0, %s98
      %s116 = sphi 0, %s116
      %s118 = sphi 0, %s116
      %s119 = sphi 0, %s118
      %s133 = sphi 0, %s119
      %s139 = sphi 0, %s141
      %s142 = sphi 0, %s139
      %s143 = sphi 0, %s142
      %s159 = sphi 0, %s143
    $region4: #{tpu_custom_call.1} parent=1 // loop_header_branch
      %22 = sbr.rel (%p20) target = $region8
    $region5: #{tpu_custom_call.1} parent=1 // loop_body
      %s24 = ssub.s32 %s19, 1
      %s25 = ssub.s32 %s19, 2
      %s26 = sadd.s32 %s19, 1
      %s27 = ssub.s32 %s19, %s26
      %p28 = scmp.eq.s32.totalorder %s27, 0
      %s30 = sadd.s32 %s29, 1
      %s31 = scalar_select %p28, %s29, %s30
      %p34 = pneg %p28
      %p35 = scmp.eq.s32.totalorder %s19, 1
      %p36 = por %p34, %p35
      %p37 = scmp.ne.s32.totalorder %s29, %s32
      %p38 = scmp.eq.s32.totalorder %s19, 0
      %p39 = por %p37, %p38
      %p40 = scmp.ne.s32.totalorder %s29, %s32
      %p41 = scmp.eq.s32.totalorder %s24, 1
      %p42 = por %p40, %p41
      %p43 = scmp.ne.s32.totalorder %s32, %s33
      %p44 = scmp.eq.s32.totalorder %s24, 0
      %p45 = por %p43, %p44
      %p46 = scmp.ne.s32.totalorder %s32, %s33
      %p47 = scmp.eq.s32.totalorder %s25, 1
      %p48 = por %p46, %p47
      %p50 = scmp.ne.s32.totalorder %s33, %s49
      %p51 = scmp.eq.s32.totalorder %s25, 0
      %p52 = por %p50, %p51
      %s54 = sadd.s32 %s53, 1
      %p57 = scmp.eq.s32.totalorder %s19, 1
      %p58 = scmp.ne.s32.totalorder %s53, %s55
      %p59 = scmp.eq.s32.totalorder %s19, 0
      %p60 = por %p58, %p59
      %p61 = scmp.ne.s32.totalorder %s53, %s55
      %p62 = scmp.eq.s32.totalorder %s24, 1
      %p63 = por %p61, %p62
      %p64 = scmp.ne.s32.totalorder %s55, %s56
      %p65 = scmp.eq.s32.totalorder %s24, 0
      %p66 = por %p64, %p65
      %p67 = scmp.ne.s32.totalorder %s55, %s56
      %p68 = scmp.eq.s32.totalorder %s25, 1
      %p69 = por %p67, %p68
      %p71 = scmp.ne.s32.totalorder %s56, %s70
      %p72 = scmp.eq.s32.totalorder %s25, 0
      %p73 = por %p71, %p72
      %s75 = sadd.s32 %s74, 1
      %p78 = scmp.eq.s32.totalorder %s19, 1
      %p79 = scmp.ne.s32.totalorder %s74, %s76
      %p80 = scmp.eq.s32.totalorder %s19, 0
      %p81 = por %p79, %p80
      %p82 = scmp.ne.s32.totalorder %s74, %s76
      %p83 = scmp.eq.s32.totalorder %s24, 1
      %p84 = por %p82, %p83
      %p85 = scmp.ne.s32.totalorder %s76, %s77
      %p86 = scmp.eq.s32.totalorder %s24, 0
      %p87 = por %p85, %p86
      %p88 = scmp.ne.s32.totalorder %s76, %s77
      %p89 = scmp.eq.s32.totalorder %s25, 1
      %p90 = por %p88, %p89
      %p92 = scmp.ne.s32.totalorder %s77, %s91
      %p93 = scmp.eq.s32.totalorder %s25, 0
      %p94 = por %p92, %p93
      %s96 = sadd.s32 %s95, 1
      %p99 = scmp.eq.s32.totalorder %s19, 1
      %p100 = scmp.ne.s32.totalorder %s95, %s97
      %p101 = scmp.eq.s32.totalorder %s19, 0
      %p102 = por %p100, %p101
      %p103 = scmp.ne.s32.totalorder %s95, %s97
      %p104 = scmp.eq.s32.totalorder %s24, 1
      %p105 = por %p103, %p104
      %p106 = scmp.ne.s32.totalorder %s97, %s98
      %p107 = scmp.eq.s32.totalorder %s24, 0
      %p108 = por %p106, %p107
      %p109 = scmp.ne.s32.totalorder %s97, %s98
      %p110 = scmp.eq.s32.totalorder %s25, 1
      %p111 = por %p109, %p110
      %p113 = scmp.ne.s32.totalorder %s98, %s112
      %p114 = scmp.eq.s32.totalorder %s25, 0
      %p115 = por %p113, %p114
      %s117 = sadd.s32 %s116, 1
      %p120 = scmp.eq.s32.totalorder %s19, 1
      %p121 = scmp.ne.s32.totalorder %s116, %s118
      %p122 = scmp.eq.s32.totalorder %s19, 0
      %p123 = por %p121, %p122
      %p124 = scmp.ne.s32.totalorder %s116, %s118
      %p125 = scmp.eq.s32.totalorder %s24, 1
      %p126 = por %p124, %p125
      %p127 = scmp.ne.s32.totalorder %s118, %s119
      %p128 = scmp.eq.s32.totalorder %s24, 0
      %p129 = por %p127, %p128
      %p130 = scmp.ne.s32.totalorder %s118, %s119
      %p131 = scmp.eq.s32.totalorder %s25, 1
      %p132 = por %p130, %p131
      %p134 = scmp.ne.s32.totalorder %s119, %s133
      %p135 = scmp.eq.s32.totalorder %s25, 0
      %p136 = por %p134, %p135
      %s137 = ssub.s32 %s19, %s26
      %p138 = scmp.eq.s32.totalorder %s137, 0
      %s140 = sadd.s32 %s139, 1
      %s141 = scalar_select %p138, %s139, %s140
      %p144 = pneg %p138
      %p145 = scmp.eq.s32.totalorder %s19, 1
      %p146 = por %p144, %p145
      %p147 = scmp.ne.s32.totalorder %s139, %s142
      %p148 = scmp.eq.s32.totalorder %s19, 0
      %p149 = por %p147, %p148
      %p150 = scmp.ne.s32.totalorder %s139, %s142
      %p151 = scmp.eq.s32.totalorder %s24, 1
      %p152 = por %p150, %p151
      %p153 = scmp.ne.s32.totalorder %s142, %s143
      %p154 = scmp.eq.s32.totalorder %s24, 0
      %p155 = por %p153, %p154
      %p156 = scmp.ne.s32.totalorder %s142, %s143
      %p157 = scmp.eq.s32.totalorder %s25, 1
      %p158 = por %p156, %p157
      %p160 = scmp.ne.s32.totalorder %s143, %s159
      %p161 = scmp.eq.s32.totalorder %s25, 0
      %p162 = por %p160, %p161
      %p163 = scmp.le.s32.totalorder 1, %s19
      %p164 = scmp.lt.s32.totalorder %s19, 3
      %p165 = pnand %p163, %p164
      %p166 = pneg %p165
      // Predicated region
      $region9: #{tpu_custom_call.1} parent=5 // pred_check
        _
      $region10: #{tpu_custom_call.1} parent=5 // pred_check_branch
        %168 = sbr.rel (%p165) target = $region12
      $region11: #{tpu_custom_call.1} parent=5 // pred_region
        %s169 = ssub.s32 %s19, 1
        // Predicated region
        $region13: #{tpu_custom_call.1} parent=11 // pred_check
          %p170 = pneg %p66
        $region14: #{tpu_custom_call.1} parent=11 // pred_check_branch
          %172 = sbr.rel (%p170) target = $region16
        $region15: #{tpu_custom_call.1} parent=11 // pred_region
          %s174 = ssub.s32 2048, 2048
          %175 = vsyncadd [#allocation6], %s174
          %s176 = sshll.u32 [#allocation5], 4
          %s177 = int_to_ptr.vmem [resolvable:$true] %s176
          %182 = dma.hbm_to_vmem [thread:$0]  %s1, 2048, %s177, [#allocation6], 128, 128, 8
        $region16: #{tpu_custom_call.1} parent=11 // pred_fallthru
          _
        // Predicated region
        $region17: #{tpu_custom_call.1} parent=11 // pred_check
          %p183 = pneg %p87
        $region18: #{tpu_custom_call.1} parent=11 // pred_check_branch
          %185 = sbr.rel (%p183) target = $region20
        $region19: #{tpu_custom_call.1} parent=11 // pred_region
          %s187 = ssub.s32 4096, 4096
          %188 = vsyncadd [#allocation6], %s187
          %s189 = sshll.u32 [#allocation7], 4
          %s190 = int_to_ptr.vmem [resolvable:$true] %s189
          %195 = dma.hbm_to_vmem [thread:$0]  %s2, 4096, %s190, [#allocation6], 128, 128, 8
        $region20: #{tpu_custom_call.1} parent=11 // pred_fallthru
          _
        // Predicated region
        $region21: #{tpu_custom_call.1} parent=11 // pred_check
          %p196 = pneg %p108
        $region22: #{tpu_custom_call.1} parent=11 // pred_check_branch
          %198 = sbr.rel (%p196) target = $region24
        $region23: #{tpu_custom_call.1} parent=11 // pred_region
          %s200 = ssub.s32 12288, 12288
          %201 = vsyncadd [#allocation9], %s200
          %s202 = sshll.u32 [#allocation8], 4
          %s203 = int_to_ptr.vmem [resolvable:$true] %s202
          %208 = dma.hbm_to_vmem [thread:$0]  %s3, 12288, %s203, [#allocation9], 384, 384, 24
        $region24: #{tpu_custom_call.1} parent=11 // pred_fallthru
          _
        // Predicated region
        $region25: #{tpu_custom_call.1} parent=11 // pred_check
          %p209 = pneg %p129
        $region26: #{tpu_custom_call.1} parent=11 // pred_check_branch
          %211 = sbr.rel (%p209) target = $region28
        $region27: #{tpu_custom_call.1} parent=11 // pred_region
          %s213 = ssub.s32 2048, 2048
          %214 = vsyncadd [#allocation9], %s213
          %s215 = sshll.u32 [#allocation10], 4
          %s216 = int_to_ptr.vmem [resolvable:$true] %s215
          %221 = dma.hbm_to_vmem [thread:$0]  %s4, 2048, %s216, [#allocation9], 128, 128, 8
        $region28: #{tpu_custom_call.1} parent=11 // pred_fallthru
          _
      $region12: #{tpu_custom_call.1} parent=5 // pred_fallthru
        _
      %p222 = scmp.lt.s32.totalorder %s19, 2
      // Predicated region
      $region29: #{tpu_custom_call.1} parent=5 // pred_check
        %p223 = pneg %p222
      $region30: #{tpu_custom_call.1} parent=5 // pred_check_branch
        %225 = sbr.rel (%p223) target = $region32
      $region31: #{tpu_custom_call.1} parent=5 // pred_region
        // Predicated region
        $region33: #{tpu_custom_call.1} parent=31 // pred_check
          %p226 = pneg %p39
        $region34: #{tpu_custom_call.1} parent=31 // pred_check_branch
          %228 = sbr.rel (%p226) target = $region36
        $region35: #{tpu_custom_call.1} parent=31 // pred_region
          %s229 = sand.u32 %s29, 1
          %s230 = scalar_lea.sflag [#allocation3], %s229
          %s231 = sand.u32 %s29, 1
          %s232 = smul.addr %s231, 8
          %s233 = scalar_lea.vmem [#allocation2], %s232
          %s235 = ssub.s32 128, 128
          %236 = vsyncadd %s230, %s235
          %s237 = smul.addr %s19, 128
          %s238 = scalar_lea.hbm %s0, %s237
          %s240 = sshll.u32 %s233, 4
          %s241 = int_to_ptr.vmem [resolvable:$true] %s240
          %243 = dma.hbm_to_vmem [thread:$0]  %s238, 128, %s241, %s230
        $region36: #{tpu_custom_call.1} parent=31 // pred_fallthru
          _
      $region32: #{tpu_custom_call.1} parent=5 // pred_fallthru
        _
      %p244 = scmp.le.s32.totalorder 1, %s19
      %p245 = scmp.lt.s32.totalorder %s19, 3
      %p246 = pnand %p244, %p245
      %p247 = pneg %p246
      // Predicated region
      $region37: #{tpu_custom_call.1} parent=5 // pred_check
        _
      $region38: #{tpu_custom_call.1} parent=5 // pred_check_branch
        %249 = sbr.rel (%p246) target = $region40
      $region39: #{tpu_custom_call.1} parent=5 // pred_region
        %s250 = ssub.s32 %s19, 1
        %s251 = sand.u32 %s32, 1
        %s252 = scalar_lea.sflag [#allocation3], %s251
        %s253 = sand.u32 %s32, 1
        %s254 = smul.addr %s253, 8
        %s255 = scalar_lea.vmem [#allocation2], %s254
        // Predicated region
        $region41: #{tpu_custom_call.1} parent=39 // pred_check
          %p256 = pneg %p45
        $region42: #{tpu_custom_call.1} parent=39 // pred_check_branch
          %258 = sbr.rel (%p256) target = $region44
        $region43: #{tpu_custom_call.1} parent=39 // pred_region
          %259 = dma.done %s252, 128
        $region44: #{tpu_custom_call.1} parent=39 // pred_fallthru
          _
        // Predicated region
        $region45: #{tpu_custom_call.1} parent=39 // pred_check
          %p260 = pneg %p66
        $region46: #{tpu_custom_call.1} parent=39 // pred_check_branch
          %262 = sbr.rel (%p260) target = $region48
        $region47: #{tpu_custom_call.1} parent=39 // pred_region
          %263 = dma.done [#allocation6], 2048
        $region48: #{tpu_custom_call.1} parent=39 // pred_fallthru
          _
        // Predicated region
        $region49: #{tpu_custom_call.1} parent=39 // pred_check
          %p264 = pneg %p87
        $region50: #{tpu_custom_call.1} parent=39 // pred_check_branch
          %266 = sbr.rel (%p264) target = $region52
        $region51: #{tpu_custom_call.1} parent=39 // pred_region
          %267 = dma.done [#allocation6], 4096
        $region52: #{tpu_custom_call.1} parent=39 // pred_fallthru
          _
        // Predicated region
        $region53: #{tpu_custom_call.1} parent=39 // pred_check
          %p268 = pneg %p108
        $region54: #{tpu_custom_call.1} parent=39 // pred_check_branch
          %270 = sbr.rel (%p268) target = $region56
        $region55: #{tpu_custom_call.1} parent=39 // pred_region
          %271 = dma.done [#allocation9], 12288
        $region56: #{tpu_custom_call.1} parent=39 // pred_fallthru
          _
        // Predicated region
        $region57: #{tpu_custom_call.1} parent=39 // pred_check
          %p272 = pneg %p129
        $region58: #{tpu_custom_call.1} parent=39 // pred_check_branch
          %274 = sbr.rel (%p272) target = $region60
        $region59: #{tpu_custom_call.1} parent=39 // pred_region
          %275 = dma.done [#allocation9], 2048
        $region60: #{tpu_custom_call.1} parent=39 // pred_fallthru
          _
        %s276 = sand.u32 %s32, 1
        %s277 = scalar_lea.sflag [#allocation3], %s276
        %s278 = sand.u32 %s32, 1
        %s279 = smul.addr %s278, 8
        %s280 = scalar_lea.vmem [#allocation2], %s279
        %p281 = pneg %p45
        %p282 = pneg %p42
        %p283 = pneg %p66
        %p284 = pneg %p63
        %p285 = pneg %p87
        %p286 = pneg %p84
        %p287 = pneg %p108
        %p288 = pneg %p105
        %p289 = pneg %p129
        %p290 = pneg %p126
        %p291 = pneg %p155
        %p292 = pneg %p152
        %s293 = sand.u32 %s142, 1
        %s294 = scalar_lea.sflag [#allocation4], %s293
        %s295 = sand.u32 %s142, 1
        %s296 = smul.addr %s295, 8
        %s297 = scalar_lea.vmem [#allocation11], %s296
        %v298 = vld [vmem:[%s255] sm:$0xff]
        %v299 = vld [vmem:[#allocation5] sm:$0xff]
        %v300 = vld [vmem:[#allocation5 + $0x8] sm:$0xff]
        %v301 = vld [vmem:[#allocation5 + $0x10] sm:$0xff]
        %v302 = vld [vmem:[#allocation5 + $0x18] sm:$0xff]
        %v303 = vld [vmem:[#allocation5 + $0x20] sm:$0xff]
        %v304 = vld [vmem:[#allocation5 + $0x28] sm:$0xff]
        %v305 = vld [vmem:[#allocation5 + $0x30] sm:$0xff]
        %v306 = vld [vmem:[#allocation5 + $0x38] sm:$0xff]
        %v307 = vld [vmem:[#allocation5 + $0x40] sm:$0xff]
        %v308 = vld [vmem:[#allocation5 + $0x48] sm:$0xff]
        %v309 = vld [vmem:[#allocation5 + $0x50] sm:$0xff]
        %v310 = vld [vmem:[#allocation5 + $0x58] sm:$0xff]
        %v311 = vld [vmem:[#allocation5 + $0x60] sm:$0xff]
        %v312 = vld [vmem:[#allocation5 + $0x68] sm:$0xff]
        %v313 = vld [vmem:[#allocation5 + $0x70] sm:$0xff]
        %v314 = vld [vmem:[#allocation5 + $0x78] sm:$0xff]
        %315 = vmatprep.subr.mxu0 0.0
        %316 = vmatpush1.msra.mxu0 %v314
        %317 = vmatprep.subr.mxu0 0.0
        %318 = vmatpush1.msra.mxu0 %v313
        %319 = vmatprep.subr.mxu0 0.0
        %320 = vmatpush1.msra.mxu0 %v312
        %321 = vmatprep.subr.mxu0 0.0
        %322 = vmatpush1.msra.mxu0 %v311
        %323 = vmatprep.subr.mxu0 0.0
        %324 = vmatpush1.msra.mxu0 %v310
        %325 = vmatprep.subr.mxu0 0.0
        %326 = vmatpush1.msra.mxu0 %v309
        %327 = vmatprep.subr.mxu0 0.0
        %328 = vmatpush1.msra.mxu0 %v308
        %329 = vmatprep.subr.mxu0 0.0
        %330 = vmatpush1.msra.mxu0 %v307
        %331 = vmatprep.subr.mxu0 0.0
        %332 = vmatpush1.msra.mxu0 %v306
        %333 = vmatprep.subr.mxu0 0.0
        %334 = vmatpush1.msra.mxu0 %v305
        %335 = vmatprep.subr.mxu0 0.0
        %336 = vmatpush1.msra.mxu0 %v304
        %337 = vmatprep.subr.mxu0 0.0
        %338 = vmatpush1.msra.mxu0 %v303
        %339 = vmatprep.subr.mxu0 0.0
        %340 = vmatpush1.msra.mxu0 %v302
        %341 = vmatprep.subr.mxu0 0.0
        %342 = vmatpush1.msra.mxu0 %v301
        %343 = vmatprep.subr.mxu0 0.0
        %344 = vmatpush1.msra.mxu0 %v300
        %345 = vmatprep.subr.mxu0 0.0
        %346 = vmatpush1.msra.mxu0 %v299
        %347 = vmatprep.subr.mxu0 0.0
        %348 = vmatpush2.msra.mxu0 0.0
        %349 = vmatprep.subr.mxu0 0.0
        %350 = vmatpush2.msra.mxu0 0.0
        %351 = vmatprep.subr.mxu0 0.0
        %352 = vmatpush2.msra.mxu0 0.0
        %353 = vmatprep.subr.mxu0 0.0
        %354 = vmatpush2.msra.mxu0 0.0
        %355 = vmatprep.subr.mxu0 0.0
        %356 = vmatpush2.msra.mxu0 0.0
        %357 = vmatprep.subr.mxu0 0.0
        %358 = vmatpush2.msra.mxu0 0.0
        %359 = vmatprep.subr.mxu0 0.0
        %360 = vmatpush2.msra.mxu0 0.0
        %361 = vmatprep.subr.mxu0 0.0
        %362 = vmatpush2.msra.mxu0 0.0
        %363 = vmatprep.subr.mxu0 0.0
        %364 = vmatpush2.msra.mxu0 0.0
        %365 = vmatprep.subr.mxu0 0.0
        %366 = vmatpush2.msra.mxu0 0.0
        %367 = vmatprep.subr.mxu0 0.0
        %368 = vmatpush2.msra.mxu0 0.0
        %369 = vmatprep.subr.mxu0 0.0
        %370 = vmatpush2.msra.mxu0 0.0
        %371 = vmatprep.subr.mxu0 0.0
        %372 = vmatpush2.msra.mxu0 0.0
        %373 = vmatprep.subr.mxu0 0.0
        %374 = vmatpush2.msra.mxu0 0.0
        %375 = vmatprep.subr.mxu0 0.0
        %376 = vmatpush2.msra.mxu0 0.0
        %377 = vmatprep.subr.mxu0 0.0
        %378 = vmatpush2.msra.mxu0 0.0
        %379 = vmatprep.mubr.f32.mxu0 0.0
        %380 = vmatmul.mubr.f32.gmra.mxu0 %v298
        %v381 = vpop.f32.mrf.mxu0
        %v382 = vadd.f32 0.0, %v381
        %v383 = vpop.f32.mrf.mxu0
        %384 = vdwg.mxu0
        %v385 = vlaneseq
        %v386 = vshrl.u32 %v385, 7
        %v387 = vlaneseq
        %v388 = vand.u32 %v387, 127
        %vm389 = vcmp.ge.s32.totalorder %v388, %v386
        %v390 = vld [vmem:[#allocation7] sm:$0xff]
        %v391 = vld [vmem:[#allocation7 + $0x8] sm:$0xff]
        %v392 = vld [vmem:[#allocation7 + $0x10] sm:$0xff]
        %v393 = vld [vmem:[#allocation7 + $0x18] sm:$0xff]
        %v394 = vld [vmem:[#allocation7 + $0x20] sm:$0xff]
        %v395 = vld [vmem:[#allocation7 + $0x28] sm:$0xff]
        %v396 = vld [vmem:[#allocation7 + $0x30] sm:$0xff]
        %v397 = vld [vmem:[#allocation7 + $0x38] sm:$0xff]
        %v398 = vld [vmem:[#allocation7 + $0x40] sm:$0xff]
        %v399 = vld [vmem:[#allocation7 + $0x48] sm:$0xff]
        %v400 = vld [vmem:[#allocation7 + $0x50] sm:$0xff]
        %v401 = vld [vmem:[#allocation7 + $0x58] sm:$0xff]
        %v402 = vld [vmem:[#allocation7 + $0x60] sm:$0xff]
        %v403 = vld [vmem:[#allocation7 + $0x68] sm:$0xff]
        %v404 = vld [vmem:[#allocation7 + $0x70] sm:$0xff]
        %v405 = vld [vmem:[#allocation7 + $0x78] sm:$0xff]
        %v406 = vld [vmem:[#allocation8] sm:$0xff]
        %v407 = vld [vmem:[#allocation8 + $0x8] sm:$0xff]
        %v408 = vld [vmem:[#allocation8 + $0x10] sm:$0xff]
        %v409 = vld [vmem:[#allocation8 + $0x18] sm:$0xff]
        %v410 = vld [vmem:[#allocation8 + $0x20] sm:$0xff]
        %v411 = vld [vmem:[#allocation8 + $0x28] sm:$0xff]
        %v412 = vld [vmem:[#allocation8 + $0x30] sm:$0xff]
        %v413 = vld [vmem:[#allocation8 + $0x38] sm:$0xff]
        %v414 = vld [vmem:[#allocation8 + $0x40] sm:$0xff]
        %v415 = vld [vmem:[#allocation8 + $0x48] sm:$0xff]
        %v416 = vld [vmem:[#allocation8 + $0x50] sm:$0xff]
        %v417 = vld [vmem:[#allocation8 + $0x58] sm:$0xff]
        %v418 = vld [vmem:[#allocation8 + $0x60] sm:$0xff]
        %v419 = vld [vmem:[#allocation8 + $0x68] sm:$0xff]
        %v420 = vld [vmem:[#allocation8 + $0x70] sm:$0xff]
        %v421 = vld [vmem:[#allocation8 + $0x78] sm:$0xff]
        %v422 = vld [vmem:[#allocation8 + $0x80] sm:$0xff]
        %v423 = vld [vmem:[#allocation8 + $0x88] sm:$0xff]
        %v424 = vld [vmem:[#allocation8 + $0x90] sm:$0xff]
        %v425 = vld [vmem:[#allocation8 + $0x98] sm:$0xff]
        %v426 = vld [vmem:[#allocation8 + $0xa0] sm:$0xff]
        %v427 = vld [vmem:[#allocation8 + $0xa8] sm:$0xff]
        %v428 = vld [vmem:[#allocation8 + $0xb0] sm:$0xff]
        %v429 = vld [vmem:[#allocation8 + $0xb8] sm:$0xff]
        %v430 = vld [vmem:[#allocation8 + $0xc0] sm:$0xff]
        %v431 = vld [vmem:[#allocation8 + $0xc8] sm:$0xff]
        %v432 = vld [vmem:[#allocation8 + $0xd0] sm:$0xff]
        %v433 = vld [vmem:[#allocation8 + $0xd8] sm:$0xff]
        %v434 = vld [vmem:[#allocation8 + $0xe0] sm:$0xff]
        %v435 = vld [vmem:[#allocation8 + $0xe8] sm:$0xff]
        %v436 = vld [vmem:[#allocation8 + $0xf0] sm:$0xff]
        %v437 = vld [vmem:[#allocation8 + $0xf8] sm:$0xff]
        %v438 = vld [vmem:[#allocation8 + $0x100] sm:$0xff]
        %v439 = vld [vmem:[#allocation8 + $0x108] sm:$0xff]
        %v440 = vld [vmem:[#allocation8 + $0x110] sm:$0xff]
        %v441 = vld [vmem:[#allocation8 + $0x118] sm:$0xff]
        %v442 = vld [vmem:[#allocation8 + $0x120] sm:$0xff]
        %v443 = vld [vmem:[#allocation8 + $0x128] sm:$0xff]
        %v444 = vld [vmem:[#allocation8 + $0x130] sm:$0xff]
        %v445 = vld [vmem:[#allocation8 + $0x138] sm:$0xff]
        %v446 = vld [vmem:[#allocation8 + $0x140] sm:$0xff]
        %v447 = vld [vmem:[#allocation8 + $0x148] sm:$0xff]
        %v448 = vld [vmem:[#allocation8 + $0x150] sm:$0xff]
        %v449 = vld [vmem:[#allocation8 + $0x158] sm:$0xff]
        %v450 = vld [vmem:[#allocation8 + $0x160] sm:$0xff]
        %v451 = vld [vmem:[#allocation8 + $0x168] sm:$0xff]
        %v452 = vld [vmem:[#allocation8 + $0x170] sm:$0xff]
        %v453 = vld [vmem:[#allocation8 + $0x178] sm:$0xff]
        %454 = vmatprep.subr.mxu0 0.0
        %455 = vmatpush1.msra.mxu0 %v405
        %456 = vmatprep.subr.mxu0 0.0
        %457 = vmatpush1.msra.mxu0 %v404
        %458 = vmatprep.subr.mxu0 0.0
        %459 = vmatpush1.msra.mxu0 %v403
        %460 = vmatprep.subr.mxu0 0.0
        %461 = vmatpush1.msra.mxu0 %v402
        %462 = vmatprep.subr.mxu0 0.0
        %463 = vmatpush1.msra.mxu0 %v401
        %464 = vmatprep.subr.mxu0 0.0
        %465 = vmatpush1.msra.mxu0 %v400
        %466 = vmatprep.subr.mxu0 0.0
        %467 = vmatpush1.msra.mxu0 %v399
        %468 = vmatprep.subr.mxu0 0.0
        %469 = vmatpush1.msra.mxu0 %v398
        %470 = vmatprep.subr.mxu0 0.0
        %471 = vmatpush1.msra.mxu0 %v397
        %472 = vmatprep.subr.mxu0 0.0
        %473 = vmatpush1.msra.mxu0 %v396
        %474 = vmatprep.subr.mxu0 0.0
        %475 = vmatpush1.msra.mxu0 %v395
        %476 = vmatprep.subr.mxu0 0.0
        %477 = vmatpush1.msra.mxu0 %v394
        %478 = vmatprep.subr.mxu0 0.0
        %479 = vmatpush1.msra.mxu0 %v393
        %480 = vmatprep.subr.mxu0 0.0
        %481 = vmatpush1.msra.mxu0 %v392
        %482 = vmatprep.subr.mxu0 0.0
        %483 = vmatpush1.msra.mxu0 %v391
        %484 = vmatprep.subr.mxu0 0.0
        %485 = vmatpush1.msra.mxu0 %v390
        %486 = vmatprep.subr.mxu0 0.0
        %487 = vmatpush2.msra.mxu0 0.0
        %488 = vmatprep.subr.mxu0 0.0
        %489 = vmatpush2.msra.mxu0 0.0
        %490 = vmatprep.subr.mxu0 0.0
        %491 = vmatpush2.msra.mxu0 0.0
        %492 = vmatprep.subr.mxu0 0.0
        %493 = vmatpush2.msra.mxu0 0.0
        %494 = vmatprep.subr.mxu0 0.0
        %495 = vmatpush2.msra.mxu0 0.0
        %496 = vmatprep.subr.mxu0 0.0
        %497 = vmatpush2.msra.mxu0 0.0
        %498 = vmatprep.subr.mxu0 0.0
        %499 = vmatpush2.msra.mxu0 0.0
        %500 = vmatprep.subr.mxu0 0.0
        %501 = vmatpush2.msra.mxu0 0.0
        %502 = vmatprep.subr.mxu0 0.0
        %503 = vmatpush2.msra.mxu0 0.0
        %504 = vmatprep.subr.mxu0 0.0
        %505 = vmatpush2.msra.mxu0 0.0
        %506 = vmatprep.subr.mxu0 0.0
        %507 = vmatpush2.msra.mxu0 0.0
        %508 = vmatprep.subr.mxu0 0.0
        %509 = vmatpush2.msra.mxu0 0.0
        %510 = vmatprep.subr.mxu0 0.0
        %511 = vmatpush2.msra.mxu0 0.0
        %512 = vmatprep.subr.mxu0 0.0
        %513 = vmatpush2.msra.mxu0 0.0
        %514 = vmatprep.subr.mxu0 0.0
        %515 = vmatpush2.msra.mxu0 0.0
        %516 = vmatprep.subr.mxu0 0.0
        %517 = vmatpush2.msra.mxu0 0.0
        %518 = vmatprep.mubr.f32.mxu0 0.0
        %519 = vmatmul.mubr.f32.gmra.mxu0 %v382
        %v520 = vpop.f32.mrf.mxu0
        %v521 = vadd.f32 0.0, %v520
        %v522 = vpop.f32.mrf.mxu0
        %523 = vdwg.mxu0
        %524 = vmatprep.subr.mxu0 %v452
        %525 = vmatpush1.msra.mxu0 %v451
        %526 = vmatprep.subr.mxu0 %v449
        %527 = vmatpush1.msra.mxu0 %v448
        %528 = vmatprep.subr.mxu0 %v446
        %529 = vmatpush1.msra.mxu0 %v445
        %530 = vmatprep.subr.mxu0 %v443
        %531 = vmatpush1.msra.mxu0 %v442
        %532 = vmatprep.subr.mxu0 %v440
        %533 = vmatpush1.msra.mxu0 %v439
        %534 = vmatprep.subr.mxu0 %v437
        %535 = vmatpush1.msra.mxu0 %v436
        %536 = vmatprep.subr.mxu0 %v434
        %537 = vmatpush1.msra.mxu0 %v433
        %538 = vmatprep.subr.mxu0 %v431
        %539 = vmatpush1.msra.mxu0 %v430
        %540 = vmatprep.subr.mxu0 %v428
        %541 = vmatpush1.msra.mxu0 %v427
        %542 = vmatprep.subr.mxu0 %v425
        %543 = vmatpush1.msra.mxu0 %v424
        %544 = vmatprep.subr.mxu0 %v422
        %545 = vmatpush1.msra.mxu0 %v421
        %546 = vmatprep.subr.mxu0 %v419
        %547 = vmatpush1.msra.mxu0 %v418
        %548 = vmatprep.subr.mxu0 %v416
        %549 = vmatpush1.msra.mxu0 %v415
        %550 = vmatprep.subr.mxu0 %v413
        %551 = vmatpush1.msra.mxu0 %v412
        %552 = vmatprep.subr.mxu0 %v410
        %553 = vmatpush1.msra.mxu0 %v409
        %554 = vmatprep.subr.mxu0 %v407
        %555 = vmatpush1.msra.mxu0 %v406
        %556 = vmatprep.subr.mxu0 0.0
        %557 = vmatpush2.msra.mxu0 0.0
        %558 = vmatprep.subr.mxu0 0.0
        %559 = vmatpush2.msra.mxu0 0.0
        %560 = vmatprep.subr.mxu0 0.0
        %561 = vmatpush2.msra.mxu0 0.0
        %562 = vmatprep.subr.mxu0 0.0
        %563 = vmatpush2.msra.mxu0 0.0
        %564 = vmatprep.subr.mxu0 0.0
        %565 = vmatpush2.msra.mxu0 0.0
        %566 = vmatprep.subr.mxu0 0.0
        %567 = vmatpush2.msra.mxu0 0.0
        %568 = vmatprep.subr.mxu0 0.0
        %569 = vmatpush2.msra.mxu0 0.0
        %570 = vmatprep.subr.mxu0 0.0
        %571 = vmatpush2.msra.mxu0 0.0
        %572 = vmatprep.subr.mxu0 0.0
        %573 = vmatpush2.msra.mxu0 0.0
        %574 = vmatprep.subr.mxu0 0.0
        %575 = vmatpush2.msra.mxu0 0.0
        %576 = vmatprep.subr.mxu0 0.0
        %577 = vmatpush2.msra.mxu0 0.0
        %578 = vmatprep.subr.mxu0 0.0
        %579 = vmatpush2.msra.mxu0 0.0
        %580 = vmatprep.subr.mxu0 0.0
        %581 = vmatpush2.msra.mxu0 0.0
        %582 = vmatprep.subr.mxu0 0.0
        %583 = vmatpush2.msra.mxu0 0.0
        %584 = vmatprep.subr.mxu0 0.0
        %585 = vmatpush2.msra.mxu0 0.0
        %586 = vmatprep.subr.mxu0 0.0
        %587 = vmatpush2.msra.mxu0 0.0
        %588 = vmatprep.mubr.f32.mxu0 0.0
        %589 = vmatmul.mubr.f32.gmra.mxu0 %v521
        %v590 = vpop.f32.mrf.mxu0
        %v591 = vadd.f32 0.0, %v590
        %v592 = vpop.f32.mrf.mxu0
        %v593 = vadd.f32 0.0, %v592
        %594 = vdwg.mxu0
        %595 = vmatprep.subr.mxu0 0.0
        %596 = vmatpush1.msra.mxu0 %v453
        %597 = vmatprep.subr.mxu0 0.0
        %598 = vmatpush1.msra.mxu0 %v450
        %599 = vmatprep.subr.mxu0 0.0
        %600 = vmatpush1.msra.mxu0 %v447
        %601 = vmatprep.subr.mxu0 0.0
        %602 = vmatpush1.msra.mxu0 %v444
        %603 = vmatprep.subr.mxu0 0.0
        %604 = vmatpush1.msra.mxu0 %v441
        %605 = vmatprep.subr.mxu0 0.0
        %606 = vmatpush1.msra.mxu0 %v438
        %607 = vmatprep.subr.mxu0 0.0
        %608 = vmatpush1.msra.mxu0 %v435
        %609 = vmatprep.subr.mxu0 0.0
        %610 = vmatpush1.msra.mxu0 %v432
        %611 = vmatprep.subr.mxu0 0.0
        %612 = vmatpush1.msra.mxu0 %v429
        %613 = vmatprep.subr.mxu0 0.0
        %614 = vmatpush1.msra.mxu0 %v426
        %615 = vmatprep.subr.mxu0 0.0
        %616 = vmatpush1.msra.mxu0 %v423
        %617 = vmatprep.subr.mxu0 0.0
        %618 = vmatpush1.msra.mxu0 %v420
        %619 = vmatprep.subr.mxu0 0.0
        %620 = vmatpush1.msra.mxu0 %v417
        %621 = vmatprep.subr.mxu0 0.0
        %622 = vmatpush1.msra.mxu0 %v414
        %623 = vmatprep.subr.mxu0 0.0
        %624 = vmatpush1.msra.mxu0 %v411
        %625 = vmatprep.subr.mxu0 0.0
        %626 = vmatpush1.msra.mxu0 %v408
        %627 = vmatprep.subr.mxu0 0.0
        %628 = vmatpush2.msra.mxu0 0.0
        %629 = vmatprep.subr.mxu0 0.0
        %630 = vmatpush2.msra.mxu0 0.0
        %631 = vmatprep.subr.mxu0 0.0
        %632 = vmatpush2.msra.mxu0 0.0
        %633 = vmatprep.subr.mxu0 0.0
        %634 = vmatpush2.msra.mxu0 0.0
        %635 = vmatprep.subr.mxu0 0.0
        %636 = vmatpush2.msra.mxu0 0.0
        %637 = vmatprep.subr.mxu0 0.0
        %638 = vmatpush2.msra.mxu0 0.0
        %639 = vmatprep.subr.mxu0 0.0
        %640 = vmatpush2.msra.mxu0 0.0
        %641 = vmatprep.subr.mxu0 0.0
        %642 = vmatpush2.msra.mxu0 0.0
        %643 = vmatprep.subr.mxu0 0.0
        %644 = vmatpush2.msra.mxu0 0.0
        %645 = vmatprep.subr.mxu0 0.0
        %646 = vmatpush2.msra.mxu0 0.0
        %647 = vmatprep.subr.mxu0 0.0
        %648 = vmatpush2.msra.mxu0 0.0
        %649 = vmatprep.subr.mxu0 0.0
        %650 = vmatpush2.msra.mxu0 0.0
        %651 = vmatprep.subr.mxu0 0.0
        %652 = vmatpush2.msra.mxu0 0.0
        %653 = vmatprep.subr.mxu0 0.0
        %654 = vmatpush2.msra.mxu0 0.0
        %655 = vmatprep.subr.mxu0 0.0
        %656 = vmatpush2.msra.mxu0 0.0
        %657 = vmatprep.subr.mxu0 0.0
        %658 = vmatpush2.msra.mxu0 0.0
        %659 = vmatprep.mubr.f32.mxu0 0.0
        %660 = vmatmul.mubr.f32.gmra.mxu0 %v521
        %v661 = vpop.f32.mrf.mxu0
        %v662 = vadd.f32 0.0, %v661
        %v663 = vpop.f32.mrf.mxu0
        %664 = vdwg.mxu0
        %665 = vmatprep.subr.mxu0 0.0
        %666 = vmatpush1.xpose.msra.mxu0 0.0
        %667 = vmatprep.subr.mxu0 0.0
        %668 = vmatpush1.xpose.msra.mxu0 0.0
        %669 = vmatprep.subr.mxu0 0.0
        %670 = vmatpush1.xpose.msra.mxu0 0.0
        %671 = vmatprep.subr.mxu0 0.0
        %672 = vmatpush1.xpose.msra.mxu0 0.0
        %673 = vmatprep.subr.mxu0 0.0
        %674 = vmatpush1.xpose.msra.mxu0 0.0
        %675 = vmatprep.subr.mxu0 0.0
        %676 = vmatpush1.xpose.msra.mxu0 0.0
        %677 = vmatprep.subr.mxu0 0.0
        %678 = vmatpush1.xpose.msra.mxu0 0.0
        %679 = vmatprep.subr.mxu0 0.0
        %680 = vmatpush1.xpose.msra.mxu0 0.0
        %681 = vmatprep.subr.mxu0 0.0
        %682 = vmatpush1.xpose.msra.mxu0 0.0
        %683 = vmatprep.subr.mxu0 0.0
        %684 = vmatpush1.xpose.msra.mxu0 0.0
        %685 = vmatprep.subr.mxu0 0.0
        %686 = vmatpush1.xpose.msra.mxu0 0.0
        %687 = vmatprep.subr.mxu0 0.0
        %688 = vmatpush1.xpose.msra.mxu0 0.0
        %689 = vmatprep.subr.mxu0 0.0
        %690 = vmatpush1.xpose.msra.mxu0 0.0
        %691 = vmatprep.subr.mxu0 0.0
        %692 = vmatpush1.xpose.msra.mxu0 0.0
        %693 = vmatprep.subr.mxu0 0.0
        %694 = vmatpush1.xpose.msra.mxu0 0.0
        %695 = vmatprep.subr.mxu0 0.0
        %696 = vmatpush1.xpose.msra.mxu0 %v591
        %697 = vmatprep.subr.mxu0 0.0
        %698 = vmatpush2.xpose.msra.mxu0 0.0
        %699 = vmatprep.subr.mxu0 0.0
        %700 = vmatpush2.xpose.msra.mxu0 0.0
        %701 = vmatprep.subr.mxu0 0.0
        %702 = vmatpush2.xpose.msra.mxu0 0.0
        %703 = vmatprep.subr.mxu0 0.0
        %704 = vmatpush2.xpose.msra.mxu0 0.0
        %705 = vmatprep.subr.mxu0 0.0
        %706 = vmatpush2.xpose.msra.mxu0 0.0
        %707 = vmatprep.subr.mxu0 0.0
        %708 = vmatpush2.xpose.msra.mxu0 0.0
        %709 = vmatprep.subr.mxu0 0.0
        %710 = vmatpush2.xpose.msra.mxu0 0.0
        %711 = vmatprep.subr.mxu0 0.0
        %712 = vmatpush2.xpose.msra.mxu0 0.0
        %713 = vmatprep.subr.mxu0 0.0
        %714 = vmatpush2.xpose.msra.mxu0 0.0
        %715 = vmatprep.subr.mxu0 0.0
        %716 = vmatpush2.xpose.msra.mxu0 0.0
        %717 = vmatprep.subr.mxu0 0.0
        %718 = vmatpush2.xpose.msra.mxu0 0.0
        %719 = vmatprep.subr.mxu0 0.0
        %720 = vmatpush2.xpose.msra.mxu0 0.0
        %721 = vmatprep.subr.mxu0 0.0
        %722 = vmatpush2.xpose.msra.mxu0 0.0
        %723 = vmatprep.subr.mxu0 0.0
        %724 = vmatpush2.xpose.msra.mxu0 0.0
        %725 = vmatprep.subr.mxu0 0.0
        %726 = vmatpush2.xpose.msra.mxu0 0.0
        %727 = vmatprep.subr.mxu0 0.0
        %728 = vmatpush2.xpose.msra.mxu0 0.0
        %729 = vmatprep.mubr.f32.mxu0 0.0
        %730 = vmatmul.mubr.f32.gmra.mxu0 %v593
        %v731 = vpop.f32.mrf.mxu0
        %v732 = vadd.f32 0.0, %v731
        %v733 = vpop.f32.mrf.mxu0
        %734 = vdwg.mxu0
        %v735 = vsel %vm389, %v732, 0.0
        %vm736 = vcmask 64512
        %v738 = vsel %vm736, %v735, 0
        %740 = vmatprep.subr.mxu0 0.0
        %741 = vmatpush1.msra.mxu0 0.0
        %742 = vmatprep.subr.mxu0 0.0
        %743 = vmatpush1.msra.mxu0 0.0
        %744 = vmatprep.subr.mxu0 0.0
        %745 = vmatpush1.msra.mxu0 0.0
        %746 = vmatprep.subr.mxu0 0.0
        %747 = vmatpush1.msra.mxu0 0.0
        %748 = vmatprep.subr.mxu0 0.0
        %749 = vmatpush1.msra.mxu0 0.0
        %750 = vmatprep.subr.mxu0 0.0
        %751 = vmatpush1.msra.mxu0 0.0
        %752 = vmatprep.subr.mxu0 0.0
        %753 = vmatpush1.msra.mxu0 0.0
        %754 = vmatprep.subr.mxu0 0.0
        %755 = vmatpush1.msra.mxu0 0.0
        %756 = vmatprep.subr.mxu0 0.0
        %757 = vmatpush1.msra.mxu0 0.0
        %758 = vmatprep.subr.mxu0 0.0
        %759 = vmatpush1.msra.mxu0 0.0
        %760 = vmatprep.subr.mxu0 0.0
        %761 = vmatpush1.msra.mxu0 0.0
        %762 = vmatprep.subr.mxu0 0.0
        %763 = vmatpush1.msra.mxu0 0.0
        %764 = vmatprep.subr.mxu0 0.0
        %765 = vmatpush1.msra.mxu0 0.0
        %766 = vmatprep.subr.mxu0 0.0
        %767 = vmatpush1.msra.mxu0 0.0
        %768 = vmatprep.subr.mxu0 0.0
        %769 = vmatpush1.msra.mxu0 0.0
        %770 = vmatprep.subr.mxu0 0.0
        %771 = vmatpush1.msra.mxu0 %v662
        %772 = vmatprep.subr.mxu0 0.0
        %773 = vmatpush2.msra.mxu0 0.0
        %774 = vmatprep.subr.mxu0 0.0
        %775 = vmatpush2.msra.mxu0 0.0
        %776 = vmatprep.subr.mxu0 0.0
        %777 = vmatpush2.msra.mxu0 0.0
        %778 = vmatprep.subr.mxu0 0.0
        %779 = vmatpush2.msra.mxu0 0.0
        %780 = vmatprep.subr.mxu0 0.0
        %781 = vmatpush2.msra.mxu0 0.0
        %782 = vmatprep.subr.mxu0 0.0
        %783 = vmatpush2.msra.mxu0 0.0
        %784 = vmatprep.subr.mxu0 0.0
        %785 = vmatpush2.msra.mxu0 0.0
        %786 = vmatprep.subr.mxu0 0.0
        %787 = vmatpush2.msra.mxu0 0.0
        %788 = vmatprep.subr.mxu0 0.0
        %789 = vmatpush2.msra.mxu0 0.0
        %790 = vmatprep.subr.mxu0 0.0
        %791 = vmatpush2.msra.mxu0 0.0
        %792 = vmatprep.subr.mxu0 0.0
        %793 = vmatpush2.msra.mxu0 0.0
        %794 = vmatprep.subr.mxu0 0.0
        %795 = vmatpush2.msra.mxu0 0.0
        %796 = vmatprep.subr.mxu0 0.0
        %797 = vmatpush2.msra.mxu0 0.0
        %798 = vmatprep.subr.mxu0 0.0
        %799 = vmatpush2.msra.mxu0 0.0
        %800 = vmatprep.subr.mxu0 0.0
        %801 = vmatpush2.msra.mxu0 0.0
        %802 = vmatprep.subr.mxu0 0.0
        %803 = vmatpush2.msra.mxu0 0.0
        %804 = vmatprep.mubr.f32.mxu0 0.0
        %805 = vmatmul.mubr.f32.gmra.mxu0 %v738
        %v806 = vpop.f32.mrf.mxu0
        %v807 = vadd.f32 0.0, %v806
        %v808 = vpop.f32.mrf.mxu0
        %809 = vdwg.mxu0
        %v810 = vtanh.pop %v807
        %s811 = scalar_lea.vmem [#allocation7], 128
        %v812 = vld [vmem:[%s811] sm:$0xff]
        %v813 = vld [vmem:[%s811 + $0x8] sm:$0xff]
        %v814 = vld [vmem:[%s811 + $0x10] sm:$0xff]
        %v815 = vld [vmem:[%s811 + $0x18] sm:$0xff]
        %v816 = vld [vmem:[%s811 + $0x20] sm:$0xff]
        %v817 = vld [vmem:[%s811 + $0x28] sm:$0xff]
        %v818 = vld [vmem:[%s811 + $0x30] sm:$0xff]
        %v819 = vld [vmem:[%s811 + $0x38] sm:$0xff]
        %v820 = vld [vmem:[%s811 + $0x40] sm:$0xff]
        %v821 = vld [vmem:[%s811 + $0x48] sm:$0xff]
        %v822 = vld [vmem:[%s811 + $0x50] sm:$0xff]
        %v823 = vld [vmem:[%s811 + $0x58] sm:$0xff]
        %v824 = vld [vmem:[%s811 + $0x60] sm:$0xff]
        %v825 = vld [vmem:[%s811 + $0x68] sm:$0xff]
        %v826 = vld [vmem:[%s811 + $0x70] sm:$0xff]
        %v827 = vld [vmem:[%s811 + $0x78] sm:$0xff]
        %s828 = scalar_lea.vmem [#allocation8], 384
        %v829 = vld [vmem:[%s828] sm:$0xff]
        %v830 = vld [vmem:[%s828 + $0x8] sm:$0xff]
        %v831 = vld [vmem:[%s828 + $0x10] sm:$0xff]
        %v832 = vld [vmem:[%s828 + $0x18] sm:$0xff]
        %v833 = vld [vmem:[%s828 + $0x20] sm:$0xff]
        %v834 = vld [vmem:[%s828 + $0x28] sm:$0xff]
        %v835 = vld [vmem:[%s828 + $0x30] sm:$0xff]
        %v836 = vld [vmem:[%s828 + $0x38] sm:$0xff]
        %v837 = vld [vmem:[%s828 + $0x40] sm:$0xff]
        %v838 = vld [vmem:[%s828 + $0x48] sm:$0xff]
        %v839 = vld [vmem:[%s828 + $0x50] sm:$0xff]
        %v840 = vld [vmem:[%s828 + $0x58] sm:$0xff]
        %v841 = vld [vmem:[%s828 + $0x60] sm:$0xff]
        %v842 = vld [vmem:[%s828 + $0x68] sm:$0xff]
        %v843 = vld [vmem:[%s828 + $0x70] sm:$0xff]
        %v844 = vld [vmem:[%s828 + $0x78] sm:$0xff]
        %v845 = vld [vmem:[%s828 + $0x80] sm:$0xff]
        %v846 = vld [vmem:[%s828 + $0x88] sm:$0xff]
        %v847 = vld [vmem:[%s828 + $0x90] sm:$0xff]
        %v848 = vld [vmem:[%s828 + $0x98] sm:$0xff]
        %v849 = vld [vmem:[%s828 + $0xa0] sm:$0xff]
        %v850 = vld [vmem:[%s828 + $0xa8] sm:$0xff]
        %v851 = vld [vmem:[%s828 + $0xb0] sm:$0xff]
        %v852 = vld [vmem:[%s828 + $0xb8] sm:$0xff]
        %v853 = vld [vmem:[%s828 + $0xc0] sm:$0xff]
        %v854 = vld [vmem:[%s828 + $0xc8] sm:$0xff]
        %v855 = vld [vmem:[%s828 + $0xd0] sm:$0xff]
        %v856 = vld [vmem:[%s828 + $0xd8] sm:$0xff]
        %v857 = vld [vmem:[%s828 + $0xe0] sm:$0xff]
        %v858 = vld [vmem:[%s828 + $0xe8] sm:$0xff]
        %v859 = vld [vmem:[%s828 + $0xf0] sm:$0xff]
        %v860 = vld [vmem:[%s828 + $0xf8] sm:$0xff]
        %v861 = vld [vmem:[%s828 + $0x100] sm:$0xff]
        %v862 = vld [vmem:[%s828 + $0x108] sm:$0xff]
        %v863 = vld [vmem:[%s828 + $0x110] sm:$0xff]
        %v864 = vld [vmem:[%s828 + $0x118] sm:$0xff]
        %v865 = vld [vmem:[%s828 + $0x120] sm:$0xff]
        %v866 = vld [vmem:[%s828 + $0x128] sm:$0xff]
        %v867 = vld [vmem:[%s828 + $0x130] sm:$0xff]
        %v868 = vld [vmem:[%s828 + $0x138] sm:$0xff]
        %v869 = vld [vmem:[%s828 + $0x140] sm:$0xff]
        %v870 = vld [vmem:[%s828 + $0x148] sm:$0xff]
        %v871 = vld [vmem:[%s828 + $0x150] sm:$0xff]
        %v872 = vld [vmem:[%s828 + $0x158] sm:$0xff]
        %v873 = vld [vmem:[%s828 + $0x160] sm:$0xff]
        %v874 = vld [vmem:[%s828 + $0x168] sm:$0xff]
        %v875 = vld [vmem:[%s828 + $0x170] sm:$0xff]
        %v876 = vld [vmem:[%s828 + $0x178] sm:$0xff]
        %877 = vmatprep.subr.mxu0 0.0
        %878 = vmatpush1.msra.mxu0 %v827
        %879 = vmatprep.subr.mxu0 0.0
        %880 = vmatpush1.msra.mxu0 %v826
        %881 = vmatprep.subr.mxu0 0.0
        %882 = vmatpush1.msra.mxu0 %v825
        %883 = vmatprep.subr.mxu0 0.0
        %884 = vmatpush1.msra.mxu0 %v824
        %885 = vmatprep.subr.mxu0 0.0
        %886 = vmatpush1.msra.mxu0 %v823
        %887 = vmatprep.subr.mxu0 0.0
        %888 = vmatpush1.msra.mxu0 %v822
        %889 = vmatprep.subr.mxu0 0.0
        %890 = vmatpush1.msra.mxu0 %v821
        %891 = vmatprep.subr.mxu0 0.0
        %892 = vmatpush1.msra.mxu0 %v820
        %893 = vmatprep.subr.mxu0 0.0
        %894 = vmatpush1.msra.mxu0 %v819
        %895 = vmatprep.subr.mxu0 0.0
        %896 = vmatpush1.msra.mxu0 %v818
        %897 = vmatprep.subr.mxu0 0.0
        %898 = vmatpush1.msra.mxu0 %v817
        %899 = vmatprep.subr.mxu0 0.0
        %900 = vmatpush1.msra.mxu0 %v816
        %901 = vmatprep.subr.mxu0 0.0
        %902 = vmatpush1.msra.mxu0 %v815
        %903 = vmatprep.subr.mxu0 0.0
        %904 = vmatpush1.msra.mxu0 %v814
        %905 = vmatprep.subr.mxu0 0.0
        %906 = vmatpush1.msra.mxu0 %v813
        %907 = vmatprep.subr.mxu0 0.0
        %908 = vmatpush1.msra.mxu0 %v812
        %909 = vmatprep.subr.mxu0 0.0
        %910 = vmatpush2.msra.mxu0 0.0
        %911 = vmatprep.subr.mxu0 0.0
        %912 = vmatpush2.msra.mxu0 0.0
        %913 = vmatprep.subr.mxu0 0.0
        %914 = vmatpush2.msra.mxu0 0.0
        %915 = vmatprep.subr.mxu0 0.0
        %916 = vmatpush2.msra.mxu0 0.0
        %917 = vmatprep.subr.mxu0 0.0
        %918 = vmatpush2.msra.mxu0 0.0
        %919 = vmatprep.subr.mxu0 0.0
        %920 = vmatpush2.msra.mxu0 0.0
        %921 = vmatprep.subr.mxu0 0.0
        %922 = vmatpush2.msra.mxu0 0.0
        %923 = vmatprep.subr.mxu0 0.0
        %924 = vmatpush2.msra.mxu0 0.0
        %925 = vmatprep.subr.mxu0 0.0
        %926 = vmatpush2.msra.mxu0 0.0
        %927 = vmatprep.subr.mxu0 0.0
        %928 = vmatpush2.msra.mxu0 0.0
        %929 = vmatprep.subr.mxu0 0.0
        %930 = vmatpush2.msra.mxu0 0.0
        %931 = vmatprep.subr.mxu0 0.0
        %932 = vmatpush2.msra.mxu0 0.0
        %933 = vmatprep.subr.mxu0 0.0
        %934 = vmatpush2.msra.mxu0 0.0
        %935 = vmatprep.subr.mxu0 0.0
        %936 = vmatpush2.msra.mxu0 0.0
        %937 = vmatprep.subr.mxu0 0.0
        %938 = vmatpush2.msra.mxu0 0.0
        %939 = vmatprep.subr.mxu0 0.0
        %940 = vmatpush2.msra.mxu0 0.0
        %941 = vmatprep.mubr.f32.mxu0 0.0
        %942 = vmatmul.mubr.f32.gmra.mxu0 %v810
        %v943 = vpop.f32.mrf.mxu0
        %v944 = vadd.f32 0.0, %v943
        %v945 = vpop.f32.mrf.mxu0
        %946 = vdwg.mxu0
        %947 = vmatprep.subr.mxu0 %v875
        %948 = vmatpush1.msra.mxu0 %v874
        %949 = vmatprep.subr.mxu0 %v872
        %950 = vmatpush1.msra.mxu0 %v871
        %951 = vmatprep.subr.mxu0 %v869
        %952 = vmatpush1.msra.mxu0 %v868
        %953 = vmatprep.subr.mxu0 %v866
        %954 = vmatpush1.msra.mxu0 %v865
        %955 = vmatprep.subr.mxu0 %v863
        %956 = vmatpush1.msra.mxu0 %v862
        %957 = vmatprep.subr.mxu0 %v860
        %958 = vmatpush1.msra.mxu0 %v859
        %959 = vmatprep.subr.mxu0 %v857
        %960 = vmatpush1.msra.mxu0 %v856
        %961 = vmatprep.subr.mxu0 %v854
        %962 = vmatpush1.msra.mxu0 %v853
        %963 = vmatprep.subr.mxu0 %v851
        %964 = vmatpush1.msra.mxu0 %v850
        %965 = vmatprep.subr.mxu0 %v848
        %966 = vmatpush1.msra.mxu0 %v847
        %967 = vmatprep.subr.mxu0 %v845
        %968 = vmatpush1.msra.mxu0 %v844
        %969 = vmatprep.subr.mxu0 %v842
        %970 = vmatpush1.msra.mxu0 %v841
        %971 = vmatprep.subr.mxu0 %v839
        %972 = vmatpush1.msra.mxu0 %v838
        %973 = vmatprep.subr.mxu0 %v836
        %974 = vmatpush1.msra.mxu0 %v835
        %975 = vmatprep.subr.mxu0 %v833
        %976 = vmatpush1.msra.mxu0 %v832
        %977 = vmatprep.subr.mxu0 %v830
        %978 = vmatpush1.msra.mxu0 %v829
        %979 = vmatprep.subr.mxu0 0.0
        %980 = vmatpush2.msra.mxu0 0.0
        %981 = vmatprep.subr.mxu0 0.0
        %982 = vmatpush2.msra.mxu0 0.0
        %983 = vmatprep.subr.mxu0 0.0
        %984 = vmatpush2.msra.mxu0 0.0
        %985 = vmatprep.subr.mxu0 0.0
        %986 = vmatpush2.msra.mxu0 0.0
        %987 = vmatprep.subr.mxu0 0.0
        %988 = vmatpush2.msra.mxu0 0.0
        %989 = vmatprep.subr.mxu0 0.0
        %990 = vmatpush2.msra.mxu0 0.0
        %991 = vmatprep.subr.mxu0 0.0
        %992 = vmatpush2.msra.mxu0 0.0
        %993 = vmatprep.subr.mxu0 0.0
        %994 = vmatpush2.msra.mxu0 0.0
        %995 = vmatprep.subr.mxu0 0.0
        %996 = vmatpush2.msra.mxu0 0.0
        %997 = vmatprep.subr.mxu0 0.0
        %998 = vmatpush2.msra.mxu0 0.0
        %999 = vmatprep.subr.mxu0 0.0
        %1000 = vmatpush2.msra.mxu0 0.0
        %1001 = vmatprep.subr.mxu0 0.0
        %1002 = vmatpush2.msra.mxu0 0.0
        %1003 = vmatprep.subr.mxu0 0.0
        %1004 = vmatpush2.msra.mxu0 0.0
        %1005 = vmatprep.subr.mxu0 0.0
        %1006 = vmatpush2.msra.mxu0 0.0
        %1007 = vmatprep.subr.mxu0 0.0
        %1008 = vmatpush2.msra.mxu0 0.0
        %1009 = vmatprep.subr.mxu0 0.0
        %1010 = vmatpush2.msra.mxu0 0.0
        %1011 = vmatprep.mubr.f32.mxu0 0.0
        %1012 = vmatmul.mubr.f32.gmra.mxu0 %v944
        %v1013 = vpop.f32.mrf.mxu0
        %v1014 = vadd.f32 0.0, %v1013
        %v1015 = vpop.f32.mrf.mxu0
        %v1016 = vadd.f32 0.0, %v1015
        %1017 = vdwg.mxu0
        %1018 = vmatprep.subr.mxu0 0.0
        %1019 = vmatpush1.msra.mxu0 %v876
        %1020 = vmatprep.subr.mxu0 0.0
        %1021 = vmatpush1.msra.mxu0 %v873
        %1022 = vmatprep.subr.mxu0 0.0
        %1023 = vmatpush1.msra.mxu0 %v870
        %1024 = vmatprep.subr.mxu0 0.0
        %1025 = vmatpush1.msra.mxu0 %v867
        %1026 = vmatprep.subr.mxu0 0.0
        %1027 = vmatpush1.msra.mxu0 %v864
        %1028 = vmatprep.subr.mxu0 0.0
        %1029 = vmatpush1.msra.mxu0 %v861
        %1030 = vmatprep.subr.mxu0 0.0
        %1031 = vmatpush1.msra.mxu0 %v858
        %1032 = vmatprep.subr.mxu0 0.0
        %1033 = vmatpush1.msra.mxu0 %v855
        %1034 = vmatprep.subr.mxu0 0.0
        %1035 = vmatpush1.msra.mxu0 %v852
        %1036 = vmatprep.subr.mxu0 0.0
        %1037 = vmatpush1.msra.mxu0 %v849
        %1038 = vmatprep.subr.mxu0 0.0
        %1039 = vmatpush1.msra.mxu0 %v846
        %1040 = vmatprep.subr.mxu0 0.0
        %1041 = vmatpush1.msra.mxu0 %v843
        %1042 = vmatprep.subr.mxu0 0.0
        %1043 = vmatpush1.msra.mxu0 %v840
        %1044 = vmatprep.subr.mxu0 0.0
        %1045 = vmatpush1.msra.mxu0 %v837
        %1046 = vmatprep.subr.mxu0 0.0
        %1047 = vmatpush1.msra.mxu0 %v834
        %1048 = vmatprep.subr.mxu0 0.0
        %1049 = vmatpush1.msra.mxu0 %v831
        %1050 = vmatprep.subr.mxu0 0.0
        %1051 = vmatpush2.msra.mxu0 0.0
        %1052 = vmatprep.subr.mxu0 0.0
        %1053 = vmatpush2.msra.mxu0 0.0
        %1054 = vmatprep.subr.mxu0 0.0
        %1055 = vmatpush2.msra.mxu0 0.0
        %1056 = vmatprep.subr.mxu0 0.0
        %1057 = vmatpush2.msra.mxu0 0.0
        %1058 = vmatprep.subr.mxu0 0.0
        %1059 = vmatpush2.msra.mxu0 0.0
        %1060 = vmatprep.subr.mxu0 0.0
        %1061 = vmatpush2.msra.mxu0 0.0
        %1062 = vmatprep.subr.mxu0 0.0
        %1063 = vmatpush2.msra.mxu0 0.0
        %1064 = vmatprep.subr.mxu0 0.0
        %1065 = vmatpush2.msra.mxu0 0.0
        %1066 = vmatprep.subr.mxu0 0.0
        %1067 = vmatpush2.msra.mxu0 0.0
        %1068 = vmatprep.subr.mxu0 0.0
        %1069 = vmatpush2.msra.mxu0 0.0
        %1070 = vmatprep.subr.mxu0 0.0
        %1071 = vmatpush2.msra.mxu0 0.0
        %1072 = vmatprep.subr.mxu0 0.0
        %1073 = vmatpush2.msra.mxu0 0.0
        %1074 = vmatprep.subr.mxu0 0.0
        %1075 = vmatpush2.msra.mxu0 0.0
        %1076 = vmatprep.subr.mxu0 0.0
        %1077 = vmatpush2.msra.mxu0 0.0
        %1078 = vmatprep.subr.mxu0 0.0
        %1079 = vmatpush2.msra.mxu0 0.0
        %1080 = vmatprep.subr.mxu0 0.0
        %1081 = vmatpush2.msra.mxu0 0.0
        %1082 = vmatprep.mubr.f32.mxu0 0.0
        %1083 = vmatmul.mubr.f32.gmra.mxu0 %v944
        %v1084 = vpop.f32.mrf.mxu0
        %v1085 = vadd.f32 0.0, %v1084
        %v1086 = vpop.f32.mrf.mxu0
        %1087 = vdwg.mxu0
        %1088 = vmatprep.subr.mxu0 0.0
        %1089 = vmatpush1.xpose.msra.mxu0 0.0
        %1090 = vmatprep.subr.mxu0 0.0
        %1091 = vmatpush1.xpose.msra.mxu0 0.0
        %1092 = vmatprep.subr.mxu0 0.0
        %1093 = vmatpush1.xpose.msra.mxu0 0.0
        %1094 = vmatprep.subr.mxu0 0.0
        %1095 = vmatpush1.xpose.msra.mxu0 0.0
        %1096 = vmatprep.subr.mxu0 0.0
        %1097 = vmatpush1.xpose.msra.mxu0 0.0
        %1098 = vmatprep.subr.mxu0 0.0
        %1099 = vmatpush1.xpose.msra.mxu0 0.0
        %1100 = vmatprep.subr.mxu0 0.0
        %1101 = vmatpush1.xpose.msra.mxu0 0.0
        %1102 = vmatprep.subr.mxu0 0.0
        %1103 = vmatpush1.xpose.msra.mxu0 0.0
        %1104 = vmatprep.subr.mxu0 0.0
        %1105 = vmatpush1.xpose.msra.mxu0 0.0
        %1106 = vmatprep.subr.mxu0 0.0
        %1107 = vmatpush1.xpose.msra.mxu0 0.0
        %1108 = vmatprep.subr.mxu0 0.0
        %1109 = vmatpush1.xpose.msra.mxu0 0.0
        %1110 = vmatprep.subr.mxu0 0.0
        %1111 = vmatpush1.xpose.msra.mxu0 0.0
        %1112 = vmatprep.subr.mxu0 0.0
        %1113 = vmatpush1.xpose.msra.mxu0 0.0
        %1114 = vmatprep.subr.mxu0 0.0
        %1115 = vmatpush1.xpose.msra.mxu0 0.0
        %1116 = vmatprep.subr.mxu0 0.0
        %1117 = vmatpush1.xpose.msra.mxu0 0.0
        %1118 = vmatprep.subr.mxu0 0.0
        %1119 = vmatpush1.xpose.msra.mxu0 %v1014
        %1120 = vmatprep.subr.mxu0 0.0
        %1121 = vmatpush2.xpose.msra.mxu0 0.0
        %1122 = vmatprep.subr.mxu0 0.0
        %1123 = vmatpush2.xpose.msra.mxu0 0.0
        %1124 = vmatprep.subr.mxu0 0.0
        %1125 = vmatpush2.xpose.msra.mxu0 0.0
        %1126 = vmatprep.subr.mxu0 0.0
        %1127 = vmatpush2.xpose.msra.mxu0 0.0
        %1128 = vmatprep.subr.mxu0 0.0
        %1129 = vmatpush2.xpose.msra.mxu0 0.0
        %1130 = vmatprep.subr.mxu0 0.0
        %1131 = vmatpush2.xpose.msra.mxu0 0.0
        %1132 = vmatprep.subr.mxu0 0.0
        %1133 = vmatpush2.xpose.msra.mxu0 0.0
        %1134 = vmatprep.subr.mxu0 0.0
        %1135 = vmatpush2.xpose.msra.mxu0 0.0
        %1136 = vmatprep.subr.mxu0 0.0
        %1137 = vmatpush2.xpose.msra.mxu0 0.0
        %1138 = vmatprep.subr.mxu0 0.0
        %1139 = vmatpush2.xpose.msra.mxu0 0.0
        %1140 = vmatprep.subr.mxu0 0.0
        %1141 = vmatpush2.xpose.msra.mxu0 0.0
        %1142 = vmatprep.subr.mxu0 0.0
        %1143 = vmatpush2.xpose.msra.mxu0 0.0
        %1144 = vmatprep.subr.mxu0 0.0
        %1145 = vmatpush2.xpose.msra.mxu0 0.0
        %1146 = vmatprep.subr.mxu0 0.0
        %1147 = vmatpush2.xpose.msra.mxu0 0.0
        %1148 = vmatprep.subr.mxu0 0.0
        %1149 = vmatpush2.xpose.msra.mxu0 0.0
        %1150 = vmatprep.subr.mxu0 0.0
        %1151 = vmatpush2.xpose.msra.mxu0 0.0
        %1152 = vmatprep.mubr.f32.mxu0 0.0
        %1153 = vmatmul.mubr.f32.gmra.mxu0 %v1016
        %v1154 = vpop.f32.mrf.mxu0
        %v1155 = vadd.f32 0.0, %v1154
        %v1156 = vpop.f32.mrf.mxu0
        %1157 = vdwg.mxu0
        %v1158 = vsel %vm389, %v1155, 0.0
        %v1160 = vsel %vm736, %v1158, 0
        %1162 = vmatprep.subr.mxu0 0.0
        %1163 = vmatpush1.msra.mxu0 0.0
        %1164 = vmatprep.subr.mxu0 0.0
        %1165 = vmatpush1.msra.mxu0 0.0
        %1166 = vmatprep.subr.mxu0 0.0
        %1167 = vmatpush1.msra.mxu0 0.0
        %1168 = vmatprep.subr.mxu0 0.0
        %1169 = vmatpush1.msra.mxu0 0.0
        %1170 = vmatprep.subr.mxu0 0.0
        %1171 = vmatpush1.msra.mxu0 0.0
        %1172 = vmatprep.subr.mxu0 0.0
        %1173 = vmatpush1.msra.mxu0 0.0
        %1174 = vmatprep.subr.mxu0 0.0
        %1175 = vmatpush1.msra.mxu0 0.0
        %1176 = vmatprep.subr.mxu0 0.0
        %1177 = vmatpush1.msra.mxu0 0.0
        %1178 = vmatprep.subr.mxu0 0.0
        %1179 = vmatpush1.msra.mxu0 0.0
        %1180 = vmatprep.subr.mxu0 0.0
        %1181 = vmatpush1.msra.mxu0 0.0
        %1182 = vmatprep.subr.mxu0 0.0
        %1183 = vmatpush1.msra.mxu0 0.0
        %1184 = vmatprep.subr.mxu0 0.0
        %1185 = vmatpush1.msra.mxu0 0.0
        %1186 = vmatprep.subr.mxu0 0.0
        %1187 = vmatpush1.msra.mxu0 0.0
        %1188 = vmatprep.subr.mxu0 0.0
        %1189 = vmatpush1.msra.mxu0 0.0
        %1190 = vmatprep.subr.mxu0 0.0
        %1191 = vmatpush1.msra.mxu0 0.0
        %1192 = vmatprep.subr.mxu0 0.0
        %1193 = vmatpush1.msra.mxu0 %v1085
        %1194 = vmatprep.subr.mxu0 0.0
        %1195 = vmatpush2.msra.mxu0 0.0
        %1196 = vmatprep.subr.mxu0 0.0
        %1197 = vmatpush2.msra.mxu0 0.0
        %1198 = vmatprep.subr.mxu0 0.0
        %1199 = vmatpush2.msra.mxu0 0.0
        %1200 = vmatprep.subr.mxu0 0.0
        %1201 = vmatpush2.msra.mxu0 0.0
        %1202 = vmatprep.subr.mxu0 0.0
        %1203 = vmatpush2.msra.mxu0 0.0
        %1204 = vmatprep.subr.mxu0 0.0
        %1205 = vmatpush2.msra.mxu0 0.0
        %1206 = vmatprep.subr.mxu0 0.0
        %1207 = vmatpush2.msra.mxu0 0.0
        %1208 = vmatprep.subr.mxu0 0.0
        %1209 = vmatpush2.msra.mxu0 0.0
        %1210 = vmatprep.subr.mxu0 0.0
        %1211 = vmatpush2.msra.mxu0 0.0
        %1212 = vmatprep.subr.mxu0 0.0
        %1213 = vmatpush2.msra.mxu0 0.0
        %1214 = vmatprep.subr.mxu0 0.0
        %1215 = vmatpush2.msra.mxu0 0.0
        %1216 = vmatprep.subr.mxu0 0.0
        %1217 = vmatpush2.msra.mxu0 0.0
        %1218 = vmatprep.subr.mxu0 0.0
        %1219 = vmatpush2.msra.mxu0 0.0
        %1220 = vmatprep.subr.mxu0 0.0
        %1221 = vmatpush2.msra.mxu0 0.0
        %1222 = vmatprep.subr.mxu0 0.0
        %1223 = vmatpush2.msra.mxu0 0.0
        %1224 = vmatprep.subr.mxu0 0.0
        %1225 = vmatpush2.msra.mxu0 0.0
        %1226 = vmatprep.mubr.f32.mxu0 0.0
        %1227 = vmatmul.mubr.f32.gmra.mxu0 %v1160
        %v1228 = vpop.f32.mrf.mxu0
        %v1229 = vadd.f32 0.0, %v1228
        %v1230 = vpop.f32.mrf.mxu0
        %1231 = vdwg.mxu0
        %v1232 = vtanh.pop %v1229
        %v1233 = vld [vmem:[#allocation10] sm:$0xff]
        %v1234 = vld [vmem:[#allocation10 + $0x8] sm:$0xff]
        %v1235 = vld [vmem:[#allocation10 + $0x10] sm:$0xff]
        %v1236 = vld [vmem:[#allocation10 + $0x18] sm:$0xff]
        %v1237 = vld [vmem:[#allocation10 + $0x20] sm:$0xff]
        %v1238 = vld [vmem:[#allocation10 + $0x28] sm:$0xff]
        %v1239 = vld [vmem:[#allocation10 + $0x30] sm:$0xff]
        %v1240 = vld [vmem:[#allocation10 + $0x38] sm:$0xff]
        %v1241 = vld [vmem:[#allocation10 + $0x40] sm:$0xff]
        %v1242 = vld [vmem:[#allocation10 + $0x48] sm:$0xff]
        %v1243 = vld [vmem:[#allocation10 + $0x50] sm:$0xff]
        %v1244 = vld [vmem:[#allocation10 + $0x58] sm:$0xff]
        %v1245 = vld [vmem:[#allocation10 + $0x60] sm:$0xff]
        %v1246 = vld [vmem:[#allocation10 + $0x68] sm:$0xff]
        %v1247 = vld [vmem:[#allocation10 + $0x70] sm:$0xff]
        %v1248 = vld [vmem:[#allocation10 + $0x78] sm:$0xff]
        %1249 = vmatprep.subr.mxu0 0.0
        %1250 = vmatpush1.msra.mxu0 %v1248
        %1251 = vmatprep.subr.mxu0 0.0
        %1252 = vmatpush1.msra.mxu0 %v1247
        %1253 = vmatprep.subr.mxu0 0.0
        %1254 = vmatpush1.msra.mxu0 %v1246
        %1255 = vmatprep.subr.mxu0 0.0
        %1256 = vmatpush1.msra.mxu0 %v1245
        %1257 = vmatprep.subr.mxu0 0.0
        %1258 = vmatpush1.msra.mxu0 %v1244
        %1259 = vmatprep.subr.mxu0 0.0
        %1260 = vmatpush1.msra.mxu0 %v1243
        %1261 = vmatprep.subr.mxu0 0.0
        %1262 = vmatpush1.msra.mxu0 %v1242
        %1263 = vmatprep.subr.mxu0 0.0
        %1264 = vmatpush1.msra.mxu0 %v1241
        %1265 = vmatprep.subr.mxu0 0.0
        %1266 = vmatpush1.msra.mxu0 %v1240
        %1267 = vmatprep.subr.mxu0 0.0
        %1268 = vmatpush1.msra.mxu0 %v1239
        %1269 = vmatprep.subr.mxu0 0.0
        %1270 = vmatpush1.msra.mxu0 %v1238
        %1271 = vmatprep.subr.mxu0 0.0
        %1272 = vmatpush1.msra.mxu0 %v1237
        %1273 = vmatprep.subr.mxu0 0.0
        %1274 = vmatpush1.msra.mxu0 %v1236
        %1275 = vmatprep.subr.mxu0 0.0
        %1276 = vmatpush1.msra.mxu0 %v1235
        %1277 = vmatprep.subr.mxu0 0.0
        %1278 = vmatpush1.msra.mxu0 %v1234
        %1279 = vmatprep.subr.mxu0 0.0
        %1280 = vmatpush1.msra.mxu0 %v1233
        %1281 = vmatprep.subr.mxu0 0.0
        %1282 = vmatpush2.msra.mxu0 0.0
        %1283 = vmatprep.subr.mxu0 0.0
        %1284 = vmatpush2.msra.mxu0 0.0
        %1285 = vmatprep.subr.mxu0 0.0
        %1286 = vmatpush2.msra.mxu0 0.0
        %1287 = vmatprep.subr.mxu0 0.0
        %1288 = vmatpush2.msra.mxu0 0.0
        %1289 = vmatprep.subr.mxu0 0.0
        %1290 = vmatpush2.msra.mxu0 0.0
        %1291 = vmatprep.subr.mxu0 0.0
        %1292 = vmatpush2.msra.mxu0 0.0
        %1293 = vmatprep.subr.mxu0 0.0
        %1294 = vmatpush2.msra.mxu0 0.0
        %1295 = vmatprep.subr.mxu0 0.0
        %1296 = vmatpush2.msra.mxu0 0.0
        %1297 = vmatprep.subr.mxu0 0.0
        %1298 = vmatpush2.msra.mxu0 0.0
        %1299 = vmatprep.subr.mxu0 0.0
        %1300 = vmatpush2.msra.mxu0 0.0
        %1301 = vmatprep.subr.mxu0 0.0
        %1302 = vmatpush2.msra.mxu0 0.0
        %1303 = vmatprep.subr.mxu0 0.0
        %1304 = vmatpush2.msra.mxu0 0.0
        %1305 = vmatprep.subr.mxu0 0.0
        %1306 = vmatpush2.msra.mxu0 0.0
        %1307 = vmatprep.subr.mxu0 0.0
        %1308 = vmatpush2.msra.mxu0 0.0
        %1309 = vmatprep.subr.mxu0 0.0
        %1310 = vmatpush2.msra.mxu0 0.0
        %1311 = vmatprep.subr.mxu0 0.0
        %1312 = vmatpush2.msra.mxu0 0.0
        %1313 = vmatprep.mubr.f32.mxu0 0.0
        %1314 = vmatmul.mubr.f32.gmra.mxu0 %v1232
        %v1315 = vpop.f32.mrf.mxu0
        %v1316 = vadd.f32 0.0, %v1315
        %v1317 = vpop.f32.mrf.mxu0
        %1318 = vdwg.mxu0
        %1319 = vst [vmem:[%s297] sm:$0xff] %v1316
        %s1320 = sand.u32 %s142, 1
        %s1321 = scalar_lea.sflag [#allocation4], %s1320
        %s1322 = sand.u32 %s142, 1
        %s1323 = smul.addr %s1322, 8
        %s1324 = scalar_lea.vmem [#allocation11], %s1323
        // Predicated region
        $region61: #{tpu_custom_call.1} parent=39 // pred_check
          %p1325 = pneg %p152
        $region62: #{tpu_custom_call.1} parent=39 // pred_check_branch
          %1327 = sbr.rel (%p1325) target = $region64
        $region63: #{tpu_custom_call.1} parent=39 // pred_region
          %s1329 = ssub.s32 128, 128
          %1330 = vsyncadd %s1321, %s1329
          %s1331 = smul.addr %s24, 128
          %s1332 = scalar_lea.hbm %s5, %s1331
          %s1334 = sshll.u32 %s1324, 4
          %s1335 = int_to_ptr.vmem [resolvable:$true] %s1334
          %1337 = dma.vmem_to_hbm [thread:$0]  %s1335, 128, %s1332, %s1321
        $region64: #{tpu_custom_call.1} parent=39 // pred_fallthru
          _
      $region40: #{tpu_custom_call.1} parent=5 // pred_fallthru
        _
      %p1338 = scmp.le.s32.totalorder 2, %s19
      // Predicated region
      $region65: #{tpu_custom_call.1} parent=5 // pred_check
        %p1339 = pneg %p1338
      $region66: #{tpu_custom_call.1} parent=5 // pred_check_branch
        %1341 = sbr.rel (%p1339) target = $region68
      $region67: #{tpu_custom_call.1} parent=5 // pred_region
        %s1342 = ssub.s32 %s19, 2
        // Predicated region
        $region69: #{tpu_custom_call.1} parent=67 // pred_check
          %p1343 = pneg %p158
        $region70: #{tpu_custom_call.1} parent=67 // pred_check_branch
          %1345 = sbr.rel (%p1343) target = $region72
        $region71: #{tpu_custom_call.1} parent=67 // pred_region
          %s1346 = sand.u32 %s143, 1
          %s1347 = scalar_lea.sflag [#allocation4], %s1346
          %s1348 = sand.u32 %s143, 1
          %s1349 = smul.addr %s1348, 8
          %s1350 = scalar_lea.vmem [#allocation11], %s1349
          %1351 = dma.done %s1347, 128
        $region72: #{tpu_custom_call.1} parent=67 // pred_fallthru
          _
      $region68: #{tpu_custom_call.1} parent=5 // pred_fallthru
        _
    $region6: #{tpu_custom_call.1} parent=1 // loop_footer
      %s23 = sadd.s32 1, %s19
    $region7: #{tpu_custom_call.1} parent=1 // loop_footer_branch
      %18 = sbr.rel target = $region3
    $region8: #{tpu_custom_call.1} parent=1 // loop_exit
      _
    %1352 = vsyncpa [#allocation3], 1
    %s1353 = scalar_lea.sflag [#allocation3], 1
    %1354 = vsyncpa %s1353, 1
    %1355 = vsyncpa [#allocation6], 1
    %1356 = vsyncpa [#allocation9], 1
    %1357 = vsyncpa [#allocation4], 1
    %s1358 = scalar_lea.sflag [#allocation4], 1
    %1359 = vsyncpa %s1358, 1

</llo_original>
